<compile_context>
chip_gen: v5e
topology: v5e:2x2
jax: 0.10.0
libtpu: 0.0.40
codegen_flags: <defaults>
</compile_context>

<pallas_src>
import functools

import jax
import jax.numpy as jnp
from jax.experimental import pallas as pl
from jax.experimental.pallas import tpu as pltpu


# ----------------------------------------------------------------------------
# Pallas kernel: FM 2nd-order term + DNN (BN folded, eval dropout = identity).
# Everything is batch-major: (batch_tile, features).
# ----------------------------------------------------------------------------
def deepfm_kernel(
    x_ref,     # (TB, F*D)     bf16  gathered embeddings (scaled by feature_value)
    w1s_ref,   # (F*D, H1+D)   bf16  [layer-1 weight (BN-folded) | field-sum S]
    b1_ref,    # (1, H1)       f32   layer-1 bias, BN-folded
    w2_ref,    # (H1, H2)      bf16  layer-2 weight, BN-folded
    b2_ref,    # (1, H2)       f32
    w3_ref,    # (H2, OUT)     bf16  output layer
    b3_ref,    # (1, OUT)      f32
    out_ref,   # (TB, OUT)     f32   fm + dnn (FeatureLinear added outside)
    *,
    hidden1,   # H1 (static): where to split the fused layer-1 / field-sum result
):
    xb = x_ref[...]                          # (TB, F*D) bf16
    xf = xb.astype(jnp.float32)              # f32 copy for the FM sum-of-squares

    # Fused layer-1 + FM field-sum: one bf16 MXU pass over the x tile.
    y = jnp.dot(xb, w1s_ref[...], preferred_element_type=jnp.float32)  # (TB, H1+D)
    h = jnp.maximum(y[:, :hidden1] + b1_ref[...], 0.0)                 # (TB, H1)
    s = y[:, hidden1:]                       # (TB, D) = sum_f e_f (exact: S is 0/1)

    # PairwiseInteraction: 0.5 * (||sum_f e_f||^2 - sum_f ||e_f||^2), kept in f32.
    fm = 0.5 * (jnp.sum(s * s, axis=1, keepdims=True)
                - jnp.sum(xf * xf, axis=1, keepdims=True))             # (TB, 1)

    # Remaining DNN layers (Linear -> BN(folded) -> ReLU, then Linear).
    h = jnp.maximum(
        jnp.dot(h.astype(jnp.bfloat16), w2_ref[...],
                preferred_element_type=jnp.float32) + b2_ref[...], 0.0)  # (TB, H2)
    dnn = jnp.dot(h.astype(jnp.bfloat16), w3_ref[...],
                  preferred_element_type=jnp.float32) + b3_ref[...]      # (TB, OUT)

    # fm broadcasts across OUT (matches (B,OUT) + (B,1) in PyTorch).
    out_ref[...] = dnn + fm


# ----------------------------------------------------------------------------
# Batch-tile selection.
# ----------------------------------------------------------------------------
def _choose_batch_tile(batch, block_b):
    assert block_b % 128 == 0 and block_b > 0, "block_b must be a multiple of 128"
    b128 = pl.cdiv(batch, 128) * 128
    tb = min(block_b, b128)
    # v7x has 2 TensorCores: if the whole batch would be one big tile, split it in
    # two so the "parallel" axis can shard — but only when each half stays >= 512
    # (keeps single-TC chips near the HBM roofline).
    if b128 <= tb and tb >= 1024 and (tb // 2) % 128 == 0:
        tb //= 2
    return tb


# ----------------------------------------------------------------------------
# Forward: XLA glue (gather, linear pre-reduction) + one batch-tiled Pallas call.
# ----------------------------------------------------------------------------
def deepfm_forward(params, kparams, feature_idx, feature_value, *, block_b=1024):
    B, F = feature_idx.shape
    D = params["emb_table"].shape[1]
    OUT = params["lin_table"].shape[1]
    FD = F * D
    H1 = kparams["b1"].shape[1]
    H2 = kparams["b2"].shape[1]

    # FeatureEmbedding gather (data-dependent) stays in XLA; emit batch-major bf16
    # so the kernel reads exactly one bf16 HBM pass (no transpose fusion).
    # TODO(synk): move this gather in-kernel (scalar-prefetched feature_idx).
    emb = params["emb_table"][feature_idx] * feature_value[..., None]    # (B, F, D)
    x = emb.reshape(B, FD).astype(jnp.bfloat16)                          # (B, F*D)

    # FeatureLinear, pre-reduced over fields in the glue -> dense (B, OUT).
    lin = jnp.einsum("bfo,bf->bo", params["lin_table"][feature_idx],
                     feature_value) + params["lin_bias"]                 # (B, OUT)

    TB = _choose_batch_tile(B, block_b)
    B_pad = pl.cdiv(B, TB) * TB
    if B_pad != B:
        x = jnp.pad(x, ((0, B_pad - B), (0, 0)))

    grid = (B_pad // TB,)
    batch_blk = lambda i: (i, 0)   # activations / output: walk the batch axis
    const_blk = lambda i: (0, 0)   # weights: same block every step (VMEM-resident)

    flops = 2 * B_pad * (FD * (H1 + D) + H1 * H2 + H2 * OUT) + B_pad * (2 * FD + 2 * D)
    bytes_accessed = (int(x.size) * x.dtype.itemsize + B_pad * OUT * 4
                      + sum(int(v.size) * v.dtype.itemsize for v in kparams.values()))

    cp_kwargs = dict(dimension_semantics=("parallel",))
    if TB >= 4096:
        # Only needed on v5e's 16 MiB default scoped VMEM with very wide tiles.
        cp_kwargs["vmem_limit_bytes"] = 32 * 1024 * 1024

    kernel = functools.partial(deepfm_kernel, hidden1=H1)

    out = pl.pallas_call(
        kernel,
        out_shape=jax.ShapeDtypeStruct((B_pad, OUT), jnp.float32),
        grid=grid,
        in_specs=[
            pl.BlockSpec((TB, FD), batch_blk),       # x (bf16, batch-major)
            pl.BlockSpec((FD, H1 + D), const_blk),   # [w1 | S] (bf16, BN folded)
            pl.BlockSpec((1, H1), const_blk),        # b1
            pl.BlockSpec((H1, H2), const_blk),       # w2
            pl.BlockSpec((1, H2), const_blk),        # b2
            pl.BlockSpec((H2, OUT), const_blk),      # w3
            pl.BlockSpec((1, OUT), const_blk),       # b3
        ],
        out_specs=pl.BlockSpec((TB, OUT), batch_blk),
        compiler_params=pltpu.CompilerParams(**cp_kwargs),
        cost_estimate=pl.CostEstimate(flops=flops, transcendentals=0,
                                      bytes_accessed=bytes_accessed),
    )(x, kparams["w1s"], kparams["b1"], kparams["w2"], kparams["b2"],
      kparams["w3"], kparams["b3"])

    # Drop batch padding and add the linear term.
    return out[:B] + lin                                                 # (B, OUT)


# ----------------------------------------------------------------------------
# Deterministic parameter construction (synthetic init, PyTorch-module layout).
# ----------------------------------------------------------------------------
def init_params(key, num_fields, num_features, embedding_dim, out_features,
                hidden_units):
    ks = jax.random.split(key, 12)
    in_features = num_fields * embedding_dim
    h1, h2 = hidden_units

    def dense_w(k, i, o):
        s = 1.0 / jnp.sqrt(i)
        return jax.random.uniform(k, (i, o), jnp.float32, -s, s)

    def dense_b(k, i, o):
        s = 1.0 / jnp.sqrt(i)
        return jax.random.uniform(k, (1, o), jnp.float32, -s, s)

    return {
        "emb_table": 0.05 * jax.random.normal(ks[0], (num_features, embedding_dim),
                                              jnp.float32),
        "lin_table": 0.05 * jax.random.normal(ks[1], (num_features, out_features),
                                              jnp.float32),
        "lin_bias": jnp.zeros((1, out_features), jnp.float32),
        # layer 1 (Linear + BatchNorm1d eval stats)
        "w1": dense_w(ks[2], in_features, h1), "b1": dense_b(ks[3], in_features, h1),
        "gamma1": 1.0 + 0.1 * jax.random.normal(ks[4], (1, h1), jnp.float32),
        "beta1": 0.1 * jax.random.normal(ks[5], (1, h1), jnp.float32),
        "mean1": jnp.zeros((1, h1), jnp.float32), "var1": jnp.ones((1, h1), jnp.float32),
        # layer 2
        "w2": dense_w(ks[6], h1, h2), "b2": dense_b(ks[7], h1, h2),
        "gamma2": 1.0 + 0.1 * jax.random.normal(ks[8], (1, h2), jnp.float32),
        "beta2": 0.1 * jax.random.normal(ks[9], (1, h2), jnp.float32),
        "mean2": jnp.zeros((1, h2), jnp.float32), "var2": jnp.ones((1, h2), jnp.float32),
        # output layer
        "w3": dense_w(ks[10], h2, out_features), "b3": dense_b(ks[11], h2, out_features),
    }


def prepare_kernel_params(params, num_fields, embedding_dim):
    """Fold BatchNorm (eval) into weights, fuse the FM field-sum matrix into w1,
    and cast matmul operands to bf16 (biases stay f32)."""
    eps = 1e-5
    F, D = num_fields, embedding_dim

    def fold(w, b, gamma, beta, mean, var):
        scale = gamma / jnp.sqrt(var + eps)     # (1, H)
        shift = beta - mean * scale
        return w * scale, b * scale + shift     # column-scaled weight, folded bias

    w1f, b1f = fold(params["w1"], params["b1"], params["gamma1"], params["beta1"],
                    params["mean1"], params["var1"])
    w2f, b2f = fold(params["w2"], params["b2"], params["gamma2"], params["beta2"],
                    params["mean2"], params["var2"])

    # S[f*D + d, d] = 1 : field sum per embedding dim; exact in bf16 (0/1 entries).
    smat = jnp.tile(jnp.eye(D, dtype=jnp.float32), (F, 1))               # (F*D, D)
    w1s = jnp.concatenate([w1f, smat], axis=1).astype(jnp.bfloat16)      # (F*D, H1+D)

    return {
        "w1s": w1s,                                  # (F*D, H1+D) bf16
        "b1": b1f,                                   # (1, H1)     f32
        "w2": w2f.astype(jnp.bfloat16),              # (H1, H2)
        "b2": b2f,                                   # (1, H2)
        "w3": params["w3"].astype(jnp.bfloat16),     # (H2, OUT)
        "b3": params["b3"],                          # (1, OUT)
    }


# ----------------------------------------------------------------------------
# Pure-JAX f32 reference (explicit eval-mode BatchNorm) for correctness check.
# ----------------------------------------------------------------------------
def deepfm_reference(params, feature_idx, feature_value):
    eps = 1e-5
    emb = params["emb_table"][feature_idx] * feature_value[..., None]
    lin = jnp.einsum("bfo,bf->bo", params["lin_table"][feature_idx],
                     feature_value) + params["lin_bias"]
    s = jnp.sum(emb, axis=1)
    sq = jnp.sum(emb * emb, axis=1)
    fm = 0.5 * jnp.sum(s * s - sq, axis=-1, keepdims=True)
    x = emb.reshape(emb.shape[0], -1)
    h = x @ params["w1"] + params["b1"]
    h = (h - params["mean1"]) / jnp.sqrt(params["var1"] + eps) * params["gamma1"] + params["beta1"]
    h = jnp.maximum(h, 0.0)
    h = h @ params["w2"] + params["b2"]
    h = (h - params["mean2"]) / jnp.sqrt(params["var2"] + eps) * params["gamma2"] + params["beta2"]
    h = jnp.maximum(h, 0.0)
    dnn = h @ params["w3"] + params["b3"]
    return lin + fm + dnn


if __name__ == "__main__":
    NUM_FIELDS = 8
    NUM_FEATURES = 64
    EMBEDDING_DIM = 8
    OUT_FEATURES = 4
    HIDDEN_UNITS = [32, 16]
    # dropout_rates = [0.1, 0.1]  # eval mode -> identity

    key = jax.random.PRNGKey(0)
    k_params, k_data = jax.random.split(key)

    params = init_params(k_params, NUM_FIELDS, NUM_FEATURES, EMBEDDING_DIM,
                         OUT_FEATURES, HIDDEN_UNITS)
    kparams = prepare_kernel_params(params, NUM_FIELDS, EMBEDDING_DIM)

    # (B, block_b): single 512-wide tile; megacore split (2x512); multi-step grid
    # with batch padding.
    configs = [(512, 1024), (1024, 1024), (1200, 512)]
    for B, bb in configs:
        k_data, k_idx, k_val = jax.random.split(k_data, 3)
        feature_idx = jax.random.randint(k_idx, (B, NUM_FIELDS), 0, NUM_FEATURES,
                                         dtype=jnp.int32)
        feature_value = jax.random.uniform(k_val, (B, NUM_FIELDS), dtype=jnp.float32)

        fwd = jax.jit(functools.partial(deepfm_forward, params, kparams, block_b=bb))
        out = fwd(feature_idx, feature_value)
        jax.block_until_ready(out)

        ref = deepfm_reference(params, feature_idx, feature_value)
        assert out.shape == (B, OUT_FEATURES)
        max_err = float(jnp.max(jnp.abs(out - ref)))
        # bf16 matmul operands / bf16 activation stream (f32 accumulation).
        assert jnp.allclose(out, ref, atol=2e-2, rtol=2e-2), \
            f"mismatch at B={B}: {max_err}"

    print("KERNEL_OK")
</pallas_src>

<mosaic_0001>
module attributes {stable_mosaic.version = 11 : i64} {
  func.func @deepfm_kernel(%arg0: i32, %arg1: memref<512x64xbf16, #tpu.memory_space<vmem>>, %arg2: memref<64x40xbf16, #tpu.memory_space<vmem>>, %arg3: memref<1x32xf32, #tpu.memory_space<vmem>>, %arg4: memref<32x16xbf16, #tpu.memory_space<vmem>>, %arg5: memref<1x16xf32, #tpu.memory_space<vmem>>, %arg6: memref<16x4xbf16, #tpu.memory_space<vmem>>, %arg7: memref<1x4xf32, #tpu.memory_space<vmem>>, %arg8: memref<512x4xf32, #tpu.memory_space<vmem>>) attributes {dimension_semantics = [#tpu.dimension_semantics<parallel>], iteration_bounds = array<i64: 1>, scalar_prefetch = 0 : i64, scratch_operands = 0 : i64, tpu.core_type = #tpu.core_type<tc>, window_params = [{transform_indices = @transform_0, window_bounds = array<i64: 512, 64>}, {pipeline_mode = #tpu.pipeline_mode<synchronous>, transform_indices = @transform_1, window_bounds = array<i64: 64, 40>}, {pipeline_mode = #tpu.pipeline_mode<synchronous>, transform_indices = @transform_2, window_bounds = array<i64: 1, 32>}, {pipeline_mode = #tpu.pipeline_mode<synchronous>, transform_indices = @transform_3, window_bounds = array<i64: 32, 16>}, {pipeline_mode = #tpu.pipeline_mode<synchronous>, transform_indices = @transform_4, window_bounds = array<i64: 1, 16>}, {pipeline_mode = #tpu.pipeline_mode<synchronous>, transform_indices = @transform_5, window_bounds = array<i64: 16, 4>}, {pipeline_mode = #tpu.pipeline_mode<synchronous>, transform_indices = @transform_6, window_bounds = array<i64: 1, 4>}, {transform_indices = @transform_7, window_bounds = array<i64: 512, 4>}]} {
    %c0 = arith.constant 0 : index
    %c0_0 = arith.constant 0 : index
    %0 = vector.load %arg1[%c0, %c0_0] : memref<512x64xbf16, #tpu.memory_space<vmem>>, vector<512x64xbf16>
    %1 = arith.extf %0 : vector<512x64xbf16> to vector<512x64xf32>
    %c0_1 = arith.constant 0 : index
    %c0_2 = arith.constant 0 : index
    %2 = vector.load %arg2[%c0_1, %c0_2] : memref<64x40xbf16, #tpu.memory_space<vmem>>, vector<64x40xbf16>
    %cst = arith.constant dense<0.000000e+00> : vector<512x40xf32>
    %3 = tpu.matmul %0, %2, %cst {dimension_numbers = #tpu.dot_dimension_numbers<[1], [0], [0], [1], [0, 0, 1, 1], [], []>} : vector<512x64xbf16>, vector<64x40xbf16>, vector<512x40xf32> -> vector<512x40xf32>
    %4 = vector.extract_strided_slice %3 {offsets = [0, 0], sizes = [512, 32], strides = [1, 1]} : vector<512x40xf32> to vector<512x32xf32>
    %c0_3 = arith.constant 0 : index
    %c0_4 = arith.constant 0 : index
    %5 = vector.load %arg3[%c0_3, %c0_4] : memref<1x32xf32, #tpu.memory_space<vmem>>, vector<1x32xf32>
    %6 = vector.broadcast %5 : vector<1x32xf32> to vector<512x32xf32>
    %7 = arith.addf %4, %6 : vector<512x32xf32>
    %cst_5 = arith.constant 0.000000e+00 : f32
    %8 = vector.broadcast %cst_5 : f32 to vector<512x32xf32>
    %9 = arith.maximumf %7, %8 : vector<512x32xf32>
    %10 = vector.extract_strided_slice %3 {offsets = [0, 32], sizes = [512, 8], strides = [1, 1]} : vector<512x40xf32> to vector<512x8xf32>
    %11 = arith.mulf %10, %10 : vector<512x8xf32>
    %cst_6 = arith.constant dense<0.000000e+00> : vector<512xf32>
    %12 = vector.multi_reduction <add>, %11, %cst_6 [1] : vector<512x8xf32> to vector<512xf32>
    %13 = vector.shape_cast %12 : vector<512xf32> to vector<512x1xf32>
    %14 = arith.mulf %1, %1 : vector<512x64xf32>
    %cst_7 = arith.constant dense<0.000000e+00> : vector<512xf32>
    %15 = vector.multi_reduction <add>, %14, %cst_7 [1] : vector<512x64xf32> to vector<512xf32>
    %16 = vector.shape_cast %15 : vector<512xf32> to vector<512x1xf32>
    %17 = arith.subf %13, %16 : vector<512x1xf32>
    %cst_8 = arith.constant 5.000000e-01 : f32
    %18 = vector.broadcast %cst_8 : f32 to vector<512x1xf32>
    %19 = arith.mulf %18, %17 : vector<512x1xf32>
    %20 = arith.truncf %9 : vector<512x32xf32> to vector<512x32xbf16>
    %c0_9 = arith.constant 0 : index
    %c0_10 = arith.constant 0 : index
    %21 = vector.load %arg4[%c0_9, %c0_10] : memref<32x16xbf16, #tpu.memory_space<vmem>>, vector<32x16xbf16>
    %cst_11 = arith.constant dense<0.000000e+00> : vector<512x16xf32>
    %22 = tpu.matmul %20, %21, %cst_11 {dimension_numbers = #tpu.dot_dimension_numbers<[1], [0], [0], [1], [0, 0, 1, 1], [], []>} : vector<512x32xbf16>, vector<32x16xbf16>, vector<512x16xf32> -> vector<512x16xf32>
    %c0_12 = arith.constant 0 : index
    %c0_13 = arith.constant 0 : index
    %23 = vector.load %arg5[%c0_12, %c0_13] : memref<1x16xf32, #tpu.memory_space<vmem>>, vector<1x16xf32>
    %24 = vector.broadcast %23 : vector<1x16xf32> to vector<512x16xf32>
    %25 = arith.addf %22, %24 : vector<512x16xf32>
    %cst_14 = arith.constant 0.000000e+00 : f32
    %26 = vector.broadcast %cst_14 : f32 to vector<512x16xf32>
    %27 = arith.maximumf %25, %26 : vector<512x16xf32>
    %28 = arith.truncf %27 : vector<512x16xf32> to vector<512x16xbf16>
    %c0_15 = arith.constant 0 : index
    %c0_16 = arith.constant 0 : index
    %29 = vector.load %arg6[%c0_15, %c0_16] : memref<16x4xbf16, #tpu.memory_space<vmem>>, vector<16x4xbf16>
    %cst_17 = arith.constant dense<0.000000e+00> : vector<512x4xf32>
    %30 = tpu.matmul %28, %29, %cst_17 {dimension_numbers = #tpu.dot_dimension_numbers<[1], [0], [0], [1], [0, 0, 1, 1], [], []>} : vector<512x16xbf16>, vector<16x4xbf16>, vector<512x4xf32> -> vector<512x4xf32>
    %c0_18 = arith.constant 0 : index
    %c0_19 = arith.constant 0 : index
    %31 = vector.load %arg7[%c0_18, %c0_19] : memref<1x4xf32, #tpu.memory_space<vmem>>, vector<1x4xf32>
    %32 = vector.broadcast %31 : vector<1x4xf32> to vector<512x4xf32>
    %33 = arith.addf %30, %32 : vector<512x4xf32>
    %34 = vector.broadcast %19 : vector<512x1xf32> to vector<512x4xf32>
    %35 = arith.addf %33, %34 : vector<512x4xf32>
    %c0_20 = arith.constant 0 : index
    %c0_21 = arith.constant 0 : index
    %36 = vector.load %arg8[%c0_20, %c0_21] : memref<512x4xf32, #tpu.memory_space<vmem>>, vector<512x4xf32>
    tpu.vector_store %arg8[%c0_20, %c0_21], %35 {strides = array<i32>} : memref<512x4xf32, #tpu.memory_space<vmem>>, vector<512x4xf32>,
    return
  }
  func.func @transform_0(%arg0: i32) -> (i32, i32) {
    %c0_i32 = arith.constant 0 : i32
    %c0_i32_0 = arith.constant 0 : i32
    return %arg0, %c0_i32 : i32, i32
  }
  func.func @transform_1(%arg0: i32) -> (i32, i32) {
    %c0_i32 = arith.constant 0 : i32
    %c0_i32_0 = arith.constant 0 : i32
    %c0_i32_1 = arith.constant 0 : i32
    return %c0_i32, %c0_i32_0 : i32, i32
  }
  func.func @transform_2(%arg0: i32) -> (i32, i32) {
    %c0_i32 = arith.constant 0 : i32
    %c0_i32_0 = arith.constant 0 : i32
    %c0_i32_1 = arith.constant 0 : i32
    return %c0_i32, %c0_i32_0 : i32, i32
  }
  func.func @transform_3(%arg0: i32) -> (i32, i32) {
    %c0_i32 = arith.constant 0 : i32
    %c0_i32_0 = arith.constant 0 : i32
    %c0_i32_1 = arith.constant 0 : i32
    return %c0_i32, %c0_i32_0 : i32, i32
  }
  func.func @transform_4(%arg0: i32) -> (i32, i32) {
    %c0_i32 = arith.constant 0 : i32
    %c0_i32_0 = arith.constant 0 : i32
    %c0_i32_1 = arith.constant 0 : i32
    return %c0_i32, %c0_i32_0 : i32, i32
  }
  func.func @transform_5(%arg0: i32) -> (i32, i32) {
    %c0_i32 = arith.constant 0 : i32
    %c0_i32_0 = arith.constant 0 : i32
    %c0_i32_1 = arith.constant 0 : i32
    return %c0_i32, %c0_i32_0 : i32, i32
  }
  func.func @transform_6(%arg0: i32) -> (i32, i32) {
    %c0_i32 = arith.constant 0 : i32
    %c0_i32_0 = arith.constant 0 : i32
    %c0_i32_1 = arith.constant 0 : i32
    return %c0_i32, %c0_i32_0 : i32, i32
  }
  func.func @transform_7(%arg0: i32) -> (i32, i32) {
    %c0_i32 = arith.constant 0 : i32
    %c0_i32_0 = arith.constant 0 : i32
    return %arg0, %c0_i32 : i32, i32
  }
}

</mosaic_0001>

<llo_original>
// kernel: deepfm_forward.1
$region0: #{deepfm_forward.1}
  #allocation0 [shape = 'u32[]', space=smem, size = 0x4, offset = 0x4, fixed_abs, tag = 'smem constant byte address 0x4 - core index']
  #allocation1 [shape = 'u32[72,128]{1,0:T(1,128)}', space=vmem, size = 0x9000, scoped, tag = 'internal scratch']
  %s0 = inlined_call_operand.vmem [shape: bf16[512,64], index: 0, kind: input, shape index: {}]
  %s1 = inlined_call_operand.vmem [shape: bf16[64,40], index: 1, kind: input, shape index: {}]
  %s2 = inlined_call_operand.vmem [shape: f32[1,32], index: 2, kind: input, shape index: {}]
  %s3 = inlined_call_operand.vmem [shape: bf16[32,16], index: 3, kind: input, shape index: {}]
  %s4 = inlined_call_operand.vmem [shape: f32[1,16], index: 4, kind: input, shape index: {}]
  %s5 = inlined_call_operand.vmem [shape: bf16[16,4], index: 5, kind: input, shape index: {}]
  %s6 = inlined_call_operand.vmem [shape: f32[1,4], index: 6, kind: input, shape index: {}]
  %s7 = inlined_call_operand.vmem [shape: f32[512,4], index: 7, kind: output, shape index: {}]
  %s8 = sld [smem:[#allocation0]]
  $region38: #{deepfm_forward.1} parent=0
    _
  %s10 = ssub.s32 1, %s8
  %s11 = scalar_select 0, %s10, %s8
  // Predicated region
  $region2: #{deepfm_forward.1} parent=0 // pred_check
    _
  $region3: #{deepfm_forward.1} parent=0 // pred_check_branch
    %13 = sbr.rel (0) target = $region5
  $region4: #{deepfm_forward.1} parent=0 // pred_region
    _
  $region5: #{deepfm_forward.1} parent=0 // pred_fallthru
    _
  // Predicated region
  $region6: #{deepfm_forward.1} parent=0 // pred_check
    _
  $region7: #{deepfm_forward.1} parent=0 // pred_check_branch
    %15 = sbr.rel (0) target = $region9
  $region8: #{deepfm_forward.1} parent=0 // pred_region
    _
  $region9: #{deepfm_forward.1} parent=0 // pred_fallthru
    _
  // Predicated region
  $region10: #{deepfm_forward.1} parent=0 // pred_check
    _
  $region11: #{deepfm_forward.1} parent=0 // pred_check_branch
    %17 = sbr.rel (0) target = $region13
  $region12: #{deepfm_forward.1} parent=0 // pred_region
    _
  $region13: #{deepfm_forward.1} parent=0 // pred_fallthru
    _
  // Predicated region
  $region14: #{deepfm_forward.1} parent=0 // pred_check
    _
  $region15: #{deepfm_forward.1} parent=0 // pred_check_branch
    %19 = sbr.rel (0) target = $region17
  $region16: #{deepfm_forward.1} parent=0 // pred_region
    _
  $region17: #{deepfm_forward.1} parent=0 // pred_fallthru
    _
  // Predicated region
  $region18: #{deepfm_forward.1} parent=0 // pred_check
    _
  $region19: #{deepfm_forward.1} parent=0 // pred_check_branch
    %21 = sbr.rel (0) target = $region21
  $region20: #{deepfm_forward.1} parent=0 // pred_region
    _
  $region21: #{deepfm_forward.1} parent=0 // pred_fallthru
    _
  // Predicated region
  $region22: #{deepfm_forward.1} parent=0 // pred_check
    _
  $region23: #{deepfm_forward.1} parent=0 // pred_check_branch
    %23 = sbr.rel (0) target = $region25
  $region24: #{deepfm_forward.1} parent=0 // pred_region
    _
  $region25: #{deepfm_forward.1} parent=0 // pred_fallthru
    _
  // Predicated region
  $region26: #{deepfm_forward.1} parent=0 // pred_check
    _
  $region27: #{deepfm_forward.1} parent=0 // pred_check_branch
    %25 = sbr.rel (0) target = $region29
  $region28: #{deepfm_forward.1} parent=0 // pred_region
    _
  $region29: #{deepfm_forward.1} parent=0 // pred_fallthru
    _
  %v27 = vld [vmem:[%s0] sm:$0xf]
  %v28 = vld [vmem:[%s0 + $0x4] sm:$0xf]
  %v29 = vld [vmem:[%s0 + $0x8] sm:$0xf]
  %v30 = vld [vmem:[%s0 + $0xc] sm:$0xf]
  %v31 = vld [vmem:[%s0 + $0x10] sm:$0xf]
  %v32 = vld [vmem:[%s0 + $0x14] sm:$0xf]
  %v33 = vld [vmem:[%s0 + $0x18] sm:$0xf]
  %v34 = vld [vmem:[%s0 + $0x1c] sm:$0xf]
  %v35 = vld [vmem:[%s0 + $0x20] sm:$0xf]
  %v36 = vld [vmem:[%s0 + $0x24] sm:$0xf]
  %v37 = vld [vmem:[%s0 + $0x28] sm:$0xf]
  %v38 = vld [vmem:[%s0 + $0x2c] sm:$0xf]
  %v39 = vld [vmem:[%s0 + $0x30] sm:$0xf]
  %v40 = vld [vmem:[%s0 + $0x34] sm:$0xf]
  %v41 = vld [vmem:[%s0 + $0x38] sm:$0xf]
  %v42 = vld [vmem:[%s0 + $0x3c] sm:$0xf]
  %v43 = vld [vmem:[%s0 + $0x40] sm:$0xf]
  %v44 = vld [vmem:[%s0 + $0x44] sm:$0xf]
  %v45 = vld [vmem:[%s0 + $0x48] sm:$0xf]
  %v46 = vld [vmem:[%s0 + $0x4c] sm:$0xf]
  %v47 = vld [vmem:[%s0 + $0x50] sm:$0xf]
  %v48 = vld [vmem:[%s0 + $0x54] sm:$0xf]
  %v49 = vld [vmem:[%s0 + $0x58] sm:$0xf]
  %v50 = vld [vmem:[%s0 + $0x5c] sm:$0xf]
  %v51 = vld [vmem:[%s0 + $0x60] sm:$0xf]
  %v52 = vld [vmem:[%s0 + $0x64] sm:$0xf]
  %v53 = vld [vmem:[%s0 + $0x68] sm:$0xf]
  %v54 = vld [vmem:[%s0 + $0x6c] sm:$0xf]
  %v55 = vld [vmem:[%s0 + $0x70] sm:$0xf]
  %v56 = vld [vmem:[%s0 + $0x74] sm:$0xf]
  %v57 = vld [vmem:[%s0 + $0x78] sm:$0xf]
  %v58 = vld [vmem:[%s0 + $0x7c] sm:$0xf]
  %v59 = vld [vmem:[%s0 + $0x80] sm:$0xf]
  %v60 = vld [vmem:[%s0 + $0x84] sm:$0xf]
  %v61 = vld [vmem:[%s0 + $0x88] sm:$0xf]
  %v62 = vld [vmem:[%s0 + $0x8c] sm:$0xf]
  %v63 = vld [vmem:[%s0 + $0x90] sm:$0xf]
  %v64 = vld [vmem:[%s0 + $0x94] sm:$0xf]
  %v65 = vld [vmem:[%s0 + $0x98] sm:$0xf]
  %v66 = vld [vmem:[%s0 + $0x9c] sm:$0xf]
  %v67 = vld [vmem:[%s0 + $0xa0] sm:$0xf]
  %v68 = vld [vmem:[%s0 + $0xa4] sm:$0xf]
  %v69 = vld [vmem:[%s0 + $0xa8] sm:$0xf]
  %v70 = vld [vmem:[%s0 + $0xac] sm:$0xf]
  %v71 = vld [vmem:[%s0 + $0xb0] sm:$0xf]
  %v72 = vld [vmem:[%s0 + $0xb4] sm:$0xf]
  %v73 = vld [vmem:[%s0 + $0xb8] sm:$0xf]
  %v74 = vld [vmem:[%s0 + $0xbc] sm:$0xf]
  %v75 = vld [vmem:[%s0 + $0xc0] sm:$0xf]
  %v76 = vld [vmem:[%s0 + $0xc4] sm:$0xf]
  %v77 = vld [vmem:[%s0 + $0xc8] sm:$0xf]
  %v78 = vld [vmem:[%s0 + $0xcc] sm:$0xf]
  %v79 = vld [vmem:[%s0 + $0xd0] sm:$0xf]
  %v80 = vld [vmem:[%s0 + $0xd4] sm:$0xf]
  %v81 = vld [vmem:[%s0 + $0xd8] sm:$0xf]
  %v82 = vld [vmem:[%s0 + $0xdc] sm:$0xf]
  %v83 = vld [vmem:[%s0 + $0xe0] sm:$0xf]
  %v84 = vld [vmem:[%s0 + $0xe4] sm:$0xf]
  %v85 = vld [vmem:[%s0 + $0xe8] sm:$0xf]
  %v86 = vld [vmem:[%s0 + $0xec] sm:$0xf]
  %v87 = vld [vmem:[%s0 + $0xf0] sm:$0xf]
  %v88 = vld [vmem:[%s0 + $0xf4] sm:$0xf]
  %v89 = vld [vmem:[%s0 + $0xf8] sm:$0xf]
  %v90 = vld [vmem:[%s0 + $0xfc] sm:$0xf]
  %v91 = vunpack.c.l.bf16 %v27
  %v92 = vunpack.c.l.bf16 %v28
  %v93 = vunpack.c.l.bf16 %v29
  %v94 = vunpack.c.l.bf16 %v30
  %v95 = vunpack.c.l.bf16 %v31
  %v96 = vunpack.c.l.bf16 %v32
  %v97 = vunpack.c.l.bf16 %v33
  %v98 = vunpack.c.l.bf16 %v34
  %v99 = vunpack.c.l.bf16 %v35
  %v100 = vunpack.c.l.bf16 %v36
  %v101 = vunpack.c.l.bf16 %v37
  %v102 = vunpack.c.l.bf16 %v38
  %v103 = vunpack.c.l.bf16 %v39
  %v104 = vunpack.c.l.bf16 %v40
  %v105 = vunpack.c.l.bf16 %v41
  %v106 = vunpack.c.l.bf16 %v42
  %v107 = vunpack.c.l.bf16 %v43
  %v108 = vunpack.c.l.bf16 %v44
  %v109 = vunpack.c.l.bf16 %v45
  %v110 = vunpack.c.l.bf16 %v46
  %v111 = vunpack.c.l.bf16 %v47
  %v112 = vunpack.c.l.bf16 %v48
  %v113 = vunpack.c.l.bf16 %v49
  %v114 = vunpack.c.l.bf16 %v50
  %v115 = vunpack.c.l.bf16 %v51
  %v116 = vunpack.c.l.bf16 %v52
  %v117 = vunpack.c.l.bf16 %v53
  %v118 = vunpack.c.l.bf16 %v54
  %v119 = vunpack.c.l.bf16 %v55
  %v120 = vunpack.c.l.bf16 %v56
  %v121 = vunpack.c.l.bf16 %v57
  %v122 = vunpack.c.l.bf16 %v58
  %v123 = vunpack.c.l.bf16 %v59
  %v124 = vunpack.c.l.bf16 %v60
  %v125 = vunpack.c.l.bf16 %v61
  %v126 = vunpack.c.l.bf16 %v62
  %v127 = vunpack.c.l.bf16 %v63
  %v128 = vunpack.c.l.bf16 %v64
  %v129 = vunpack.c.l.bf16 %v65
  %v130 = vunpack.c.l.bf16 %v66
  %v131 = vunpack.c.l.bf16 %v67
  %v132 = vunpack.c.l.bf16 %v68
  %v133 = vunpack.c.l.bf16 %v69
  %v134 = vunpack.c.l.bf16 %v70
  %v135 = vunpack.c.l.bf16 %v71
  %v136 = vunpack.c.l.bf16 %v72
  %v137 = vunpack.c.l.bf16 %v73
  %v138 = vunpack.c.l.bf16 %v74
  %v139 = vunpack.c.l.bf16 %v75
  %v140 = vunpack.c.l.bf16 %v76
  %v141 = vunpack.c.l.bf16 %v77
  %v142 = vunpack.c.l.bf16 %v78
  %v143 = vunpack.c.l.bf16 %v79
  %v144 = vunpack.c.l.bf16 %v80
  %v145 = vunpack.c.l.bf16 %v81
  %v146 = vunpack.c.l.bf16 %v82
  %v147 = vunpack.c.l.bf16 %v83
  %v148 = vunpack.c.l.bf16 %v84
  %v149 = vunpack.c.l.bf16 %v85
  %v150 = vunpack.c.l.bf16 %v86
  %v151 = vunpack.c.l.bf16 %v87
  %v152 = vunpack.c.l.bf16 %v88
  %v153 = vunpack.c.l.bf16 %v89
  %v154 = vunpack.c.l.bf16 %v90
  %v155 = vld [vmem:[%s1] sm:$0xf]
  %v156 = vld [vmem:[%s1 + $0x4] sm:$0xf]
  %v157 = vld [vmem:[%s1 + $0x8] sm:$0xf]
  %v158 = vld [vmem:[%s1 + $0xc] sm:$0xf]
  %v159 = vld [vmem:[%s1 + $0x10] sm:$0xf]
  %v160 = vld [vmem:[%s1 + $0x14] sm:$0xf]
  %v161 = vld [vmem:[%s1 + $0x18] sm:$0xf]
  %v162 = vld [vmem:[%s1 + $0x1c] sm:$0xf]
  %v227 = vunpack.c.l.b16 %v27
  %v228 = vunpack.c.l.b16 %v28
  %v229 = vunpack.c.l.b16 %v29
  %v230 = vunpack.c.l.b16 %v30
  %v231 = vunpack.c.l.b16 %v31
  %v232 = vunpack.c.l.b16 %v32
  %v233 = vunpack.c.l.b16 %v33
  %v234 = vunpack.c.l.b16 %v34
  %v235 = vunpack.c.l.b16 %v35
  %v236 = vunpack.c.l.b16 %v36
  %v237 = vunpack.c.l.b16 %v37
  %v238 = vunpack.c.l.b16 %v38
  %v239 = vunpack.c.l.b16 %v39
  %v240 = vunpack.c.l.b16 %v40
  %v241 = vunpack.c.l.b16 %v41
  %v242 = vunpack.c.l.b16 %v42
  %v243 = vunpack.c.l.b16 %v43
  %v244 = vunpack.c.l.b16 %v44
  %v245 = vunpack.c.l.b16 %v45
  %v246 = vunpack.c.l.b16 %v46
  %v247 = vunpack.c.l.b16 %v47
  %v248 = vunpack.c.l.b16 %v48
  %v249 = vunpack.c.l.b16 %v49
  %v250 = vunpack.c.l.b16 %v50
  %v251 = vunpack.c.l.b16 %v51
  %v252 = vunpack.c.l.b16 %v52
  %v253 = vunpack.c.l.b16 %v53
  %v254 = vunpack.c.l.b16 %v54
  %v255 = vunpack.c.l.b16 %v55
  %v256 = vunpack.c.l.b16 %v56
  %v257 = vunpack.c.l.b16 %v57
  %v258 = vunpack.c.l.b16 %v58
  %v259 = vunpack.c.l.b16 %v59
  %v260 = vunpack.c.l.b16 %v60
  %v261 = vunpack.c.l.b16 %v61
  %v262 = vunpack.c.l.b16 %v62
  %v263 = vunpack.c.l.b16 %v63
  %v264 = vunpack.c.l.b16 %v64
  %v265 = vunpack.c.l.b16 %v65
  %v266 = vunpack.c.l.b16 %v66
  %v267 = vunpack.c.l.b16 %v67
  %v268 = vunpack.c.l.b16 %v68
  %v269 = vunpack.c.l.b16 %v69
  %v270 = vunpack.c.l.b16 %v70
  %v271 = vunpack.c.l.b16 %v71
  %v272 = vunpack.c.l.b16 %v72
  %v273 = vunpack.c.l.b16 %v73
  %v274 = vunpack.c.l.b16 %v74
  %v275 = vunpack.c.l.b16 %v75
  %v276 = vunpack.c.l.b16 %v76
  %v277 = vunpack.c.l.b16 %v77
  %v278 = vunpack.c.l.b16 %v78
  %v279 = vunpack.c.l.b16 %v79
  %v280 = vunpack.c.l.b16 %v80
  %v281 = vunpack.c.l.b16 %v81
  %v282 = vunpack.c.l.b16 %v82
  %v283 = vunpack.c.l.b16 %v83
  %v284 = vunpack.c.l.b16 %v84
  %v285 = vunpack.c.l.b16 %v85
  %v286 = vunpack.c.l.b16 %v86
  %v287 = vunpack.c.l.b16 %v87
  %v288 = vunpack.c.l.b16 %v88
  %v289 = vunpack.c.l.b16 %v89
  %v290 = vunpack.c.l.b16 %v90
  %v291 = vpack.c.b16 %v228, %v227
  %v292 = vpack.c.b16 %v230, %v229
  %v293 = vpack.c.b16 %v232, %v231
  %v294 = vpack.c.b16 %v234, %v233
  %v295 = vpack.c.b16 %v236, %v235
  %v296 = vpack.c.b16 %v238, %v237
  %v297 = vpack.c.b16 %v240, %v239
  %v298 = vpack.c.b16 %v242, %v241
  %v299 = vpack.c.b16 %v244, %v243
  %v300 = vpack.c.b16 %v246, %v245
  %v301 = vpack.c.b16 %v248, %v247
  %v302 = vpack.c.b16 %v250, %v249
  %v303 = vpack.c.b16 %v252, %v251
  %v304 = vpack.c.b16 %v254, %v253
  %v305 = vpack.c.b16 %v256, %v255
  %v306 = vpack.c.b16 %v258, %v257
  %v307 = vpack.c.b16 %v260, %v259
  %v308 = vpack.c.b16 %v262, %v261
  %v309 = vpack.c.b16 %v264, %v263
  %v310 = vpack.c.b16 %v266, %v265
  %v311 = vpack.c.b16 %v268, %v267
  %v312 = vpack.c.b16 %v270, %v269
  %v313 = vpack.c.b16 %v272, %v271
  %v314 = vpack.c.b16 %v274, %v273
  %v315 = vpack.c.b16 %v276, %v275
  %v316 = vpack.c.b16 %v278, %v277
  %v317 = vpack.c.b16 %v280, %v279
  %v318 = vpack.c.b16 %v282, %v281
  %v319 = vpack.c.b16 %v284, %v283
  %v320 = vpack.c.b16 %v286, %v285
  %v321 = vpack.c.b16 %v288, %v287
  %v322 = vpack.c.b16 %v290, %v289
  %v331 = vunpack.c.l.b16 %v155
  %v332 = vunpack.c.l.b16 %v156
  %v333 = vunpack.c.l.b16 %v157
  %v334 = vunpack.c.l.b16 %v158
  %v335 = vunpack.c.l.b16 %v159
  %v336 = vunpack.c.l.b16 %v160
  %v337 = vunpack.c.l.b16 %v161
  %v338 = vunpack.c.l.b16 %v162
  %v339 = vpack.c.b16 %v332, %v331
  %v340 = vpack.c.b16 %v334, %v333
  %v341 = vpack.c.b16 %v336, %v335
  %v342 = vpack.c.b16 %v338, %v337
  %vm347 = vcmask 523264
  %v349 = vsel %vm347, %v291, 0
  %v352 = vsel %vm347, %v292, 0
  %v355 = vsel %vm347, %v293, 0
  %v358 = vsel %vm347, %v294, 0
  %v361 = vsel %vm347, %v295, 0
  %v364 = vsel %vm347, %v296, 0
  %v367 = vsel %vm347, %v297, 0
  %v370 = vsel %vm347, %v298, 0
  %v373 = vsel %vm347, %v299, 0
  %v376 = vsel %vm347, %v300, 0
  %v379 = vsel %vm347, %v301, 0
  %v382 = vsel %vm347, %v302, 0
  %v385 = vsel %vm347, %v303, 0
  %v388 = vsel %vm347, %v304, 0
  %v391 = vsel %vm347, %v305, 0
  %v394 = vsel %vm347, %v306, 0
  %v397 = vsel %vm347, %v307, 0
  %v400 = vsel %vm347, %v308, 0
  %v403 = vsel %vm347, %v309, 0
  %v406 = vsel %vm347, %v310, 0
  %v409 = vsel %vm347, %v311, 0
  %v412 = vsel %vm347, %v312, 0
  %v415 = vsel %vm347, %v313, 0
  %v418 = vsel %vm347, %v314, 0
  %v421 = vsel %vm347, %v315, 0
  %v424 = vsel %vm347, %v316, 0
  %v427 = vsel %vm347, %v317, 0
  %v430 = vsel %vm347, %v318, 0
  %v433 = vsel %vm347, %v319, 0
  %v436 = vsel %vm347, %v320, 0
  %v439 = vsel %vm347, %v321, 0
  %v442 = vsel %vm347, %v322, 0
  %444 = vmatpush.bf16.msra.mxu0 0
  %445 = vmatpush.bf16.msra.mxu0 0
  %446 = vmatpush.bf16.msra.mxu0 0
  %447 = vmatpush.bf16.msra.mxu0 0
  %448 = vmatpush.bf16.msra.mxu0 %v342
  %449 = vmatpush.bf16.msra.mxu0 %v341
  %450 = vmatpush.bf16.msra.mxu0 %v340
  %451 = vmatpush.bf16.msra.mxu0 %v339
  %452 = vmatmul.bf16.gmra.mxu0 %v349
  %v453 = vpop.f32.mrf.mxu0
  %v454 = vadd.f32 0.0, %v453
  %v455 = vpop.f32.mrf.mxu0
  %v456 = vadd.f32 0.0, %v455
  %457 = vmatmul.bf16.gmra.mxu0 %v352
  %v458 = vpop.f32.mrf.mxu0
  %v459 = vadd.f32 0.0, %v458
  %v460 = vpop.f32.mrf.mxu0
  %v461 = vadd.f32 0.0, %v460
  %462 = vmatmul.bf16.gmra.mxu0 %v355
  %v463 = vpop.f32.mrf.mxu0
  %v464 = vadd.f32 0.0, %v463
  %v465 = vpop.f32.mrf.mxu0
  %v466 = vadd.f32 0.0, %v465
  %467 = vmatmul.bf16.gmra.mxu0 %v358
  %v468 = vpop.f32.mrf.mxu0
  %v469 = vadd.f32 0.0, %v468
  %v470 = vpop.f32.mrf.mxu0
  %v471 = vadd.f32 0.0, %v470
  %472 = vmatmul.bf16.gmra.mxu0 %v361
  %v473 = vpop.f32.mrf.mxu0
  %v474 = vadd.f32 0.0, %v473
  %v475 = vpop.f32.mrf.mxu0
  %v476 = vadd.f32 0.0, %v475
  %477 = vmatmul.bf16.gmra.mxu0 %v364
  %v478 = vpop.f32.mrf.mxu0
  %v479 = vadd.f32 0.0, %v478
  %v480 = vpop.f32.mrf.mxu0
  %v481 = vadd.f32 0.0, %v480
  %482 = vmatmul.bf16.gmra.mxu0 %v367
  %v483 = vpop.f32.mrf.mxu0
  %v484 = vadd.f32 0.0, %v483
  %v485 = vpop.f32.mrf.mxu0
  %v486 = vadd.f32 0.0, %v485
  %487 = vmatmul.bf16.gmra.mxu0 %v370
  %v488 = vpop.f32.mrf.mxu0
  %v489 = vadd.f32 0.0, %v488
  %v490 = vpop.f32.mrf.mxu0
  %v491 = vadd.f32 0.0, %v490
  %492 = vmatmul.bf16.gmra.mxu0 %v373
  %v493 = vpop.f32.mrf.mxu0
  %v494 = vadd.f32 0.0, %v493
  %v495 = vpop.f32.mrf.mxu0
  %v496 = vadd.f32 0.0, %v495
  %497 = vmatmul.bf16.gmra.mxu0 %v376
  %v498 = vpop.f32.mrf.mxu0
  %v499 = vadd.f32 0.0, %v498
  %v500 = vpop.f32.mrf.mxu0
  %v501 = vadd.f32 0.0, %v500
  %502 = vmatmul.bf16.gmra.mxu0 %v379
  %v503 = vpop.f32.mrf.mxu0
  %v504 = vadd.f32 0.0, %v503
  %v505 = vpop.f32.mrf.mxu0
  %v506 = vadd.f32 0.0, %v505
  %507 = vmatmul.bf16.gmra.mxu0 %v382
  %v508 = vpop.f32.mrf.mxu0
  %v509 = vadd.f32 0.0, %v508
  %v510 = vpop.f32.mrf.mxu0
  %v511 = vadd.f32 0.0, %v510
  %512 = vmatmul.bf16.gmra.mxu0 %v385
  %v513 = vpop.f32.mrf.mxu0
  %v514 = vadd.f32 0.0, %v513
  %v515 = vpop.f32.mrf.mxu0
  %v516 = vadd.f32 0.0, %v515
  %517 = vmatmul.bf16.gmra.mxu0 %v388
  %v518 = vpop.f32.mrf.mxu0
  %v519 = vadd.f32 0.0, %v518
  %v520 = vpop.f32.mrf.mxu0
  %v521 = vadd.f32 0.0, %v520
  %522 = vmatmul.bf16.gmra.mxu0 %v391
  %v523 = vpop.f32.mrf.mxu0
  %v524 = vadd.f32 0.0, %v523
  %v525 = vpop.f32.mrf.mxu0
  %v526 = vadd.f32 0.0, %v525
  %527 = vmatmul.bf16.gmra.mxu0 %v394
  %v528 = vpop.f32.mrf.mxu0
  %v529 = vadd.f32 0.0, %v528
  %v530 = vpop.f32.mrf.mxu0
  %v531 = vadd.f32 0.0, %v530
  %532 = vmatmul.bf16.gmra.mxu0 %v397
  %v533 = vpop.f32.mrf.mxu0
  %v534 = vadd.f32 0.0, %v533
  %v535 = vpop.f32.mrf.mxu0
  %v536 = vadd.f32 0.0, %v535
  %537 = vmatmul.bf16.gmra.mxu0 %v400
  %v538 = vpop.f32.mrf.mxu0
  %v539 = vadd.f32 0.0, %v538
  %v540 = vpop.f32.mrf.mxu0
  %v541 = vadd.f32 0.0, %v540
  %542 = vmatmul.bf16.gmra.mxu0 %v403
  %v543 = vpop.f32.mrf.mxu0
  %v544 = vadd.f32 0.0, %v543
  %v545 = vpop.f32.mrf.mxu0
  %v546 = vadd.f32 0.0, %v545
  %547 = vmatmul.bf16.gmra.mxu0 %v406
  %v548 = vpop.f32.mrf.mxu0
  %v549 = vadd.f32 0.0, %v548
  %v550 = vpop.f32.mrf.mxu0
  %v551 = vadd.f32 0.0, %v550
  %552 = vmatmul.bf16.gmra.mxu0 %v409
  %v553 = vpop.f32.mrf.mxu0
  %v554 = vadd.f32 0.0, %v553
  %v555 = vpop.f32.mrf.mxu0
  %v556 = vadd.f32 0.0, %v555
  %557 = vmatmul.bf16.gmra.mxu0 %v412
  %v558 = vpop.f32.mrf.mxu0
  %v559 = vadd.f32 0.0, %v558
  %v560 = vpop.f32.mrf.mxu0
  %v561 = vadd.f32 0.0, %v560
  %562 = vmatmul.bf16.gmra.mxu0 %v415
  %v563 = vpop.f32.mrf.mxu0
  %v564 = vadd.f32 0.0, %v563
  %v565 = vpop.f32.mrf.mxu0
  %v566 = vadd.f32 0.0, %v565
  %567 = vmatmul.bf16.gmra.mxu0 %v418
  %v568 = vpop.f32.mrf.mxu0
  %v569 = vadd.f32 0.0, %v568
  %v570 = vpop.f32.mrf.mxu0
  %v571 = vadd.f32 0.0, %v570
  %572 = vmatmul.bf16.gmra.mxu0 %v421
  %v573 = vpop.f32.mrf.mxu0
  %v574 = vadd.f32 0.0, %v573
  %v575 = vpop.f32.mrf.mxu0
  %v576 = vadd.f32 0.0, %v575
  %577 = vmatmul.bf16.gmra.mxu0 %v424
  %v578 = vpop.f32.mrf.mxu0
  %v579 = vadd.f32 0.0, %v578
  %v580 = vpop.f32.mrf.mxu0
  %v581 = vadd.f32 0.0, %v580
  %582 = vmatmul.bf16.gmra.mxu0 %v427
  %v583 = vpop.f32.mrf.mxu0
  %v584 = vadd.f32 0.0, %v583
  %v585 = vpop.f32.mrf.mxu0
  %v586 = vadd.f32 0.0, %v585
  %587 = vmatmul.bf16.gmra.mxu0 %v430
  %v588 = vpop.f32.mrf.mxu0
  %v589 = vadd.f32 0.0, %v588
  %v590 = vpop.f32.mrf.mxu0
  %v591 = vadd.f32 0.0, %v590
  %592 = vmatmul.bf16.gmra.mxu0 %v433
  %v593 = vpop.f32.mrf.mxu0
  %v594 = vadd.f32 0.0, %v593
  %v595 = vpop.f32.mrf.mxu0
  %v596 = vadd.f32 0.0, %v595
  %597 = vmatmul.bf16.gmra.mxu0 %v436
  %v598 = vpop.f32.mrf.mxu0
  %v599 = vadd.f32 0.0, %v598
  %v600 = vpop.f32.mrf.mxu0
  %v601 = vadd.f32 0.0, %v600
  %602 = vmatmul.bf16.gmra.mxu0 %v439
  %v603 = vpop.f32.mrf.mxu0
  %v604 = vadd.f32 0.0, %v603
  %v605 = vpop.f32.mrf.mxu0
  %v606 = vadd.f32 0.0, %v605
  %607 = vmatmul.bf16.gmra.mxu0 %v442
  %v608 = vpop.f32.mrf.mxu0
  %v609 = vadd.f32 0.0, %v608
  %v610 = vpop.f32.mrf.mxu0
  %v611 = vadd.f32 0.0, %v610
  %612 = vdwg.mxu0
  %v613 = vld [vmem:[%s2] sm:$0x1]
  %v615 = vperm.slane %v613, 0
  %v617 = vadd.f32 %v454, %v615
  %v618 = vadd.f32 %v456, %v615
  %v619 = vadd.f32 %v459, %v615
  %v620 = vadd.f32 %v461, %v615
  %v621 = vadd.f32 %v464, %v615
  %v622 = vadd.f32 %v466, %v615
  %v623 = vadd.f32 %v469, %v615
  %v624 = vadd.f32 %v471, %v615
  %v625 = vadd.f32 %v474, %v615
  %v626 = vadd.f32 %v476, %v615
  %v627 = vadd.f32 %v479, %v615
  %v628 = vadd.f32 %v481, %v615
  %v629 = vadd.f32 %v484, %v615
  %v630 = vadd.f32 %v486, %v615
  %v631 = vadd.f32 %v489, %v615
  %v632 = vadd.f32 %v491, %v615
  %v633 = vadd.f32 %v494, %v615
  %v634 = vadd.f32 %v496, %v615
  %v635 = vadd.f32 %v499, %v615
  %v636 = vadd.f32 %v501, %v615
  %v637 = vadd.f32 %v504, %v615
  %v638 = vadd.f32 %v506, %v615
  %v639 = vadd.f32 %v509, %v615
  %v640 = vadd.f32 %v511, %v615
  %v641 = vadd.f32 %v514, %v615
  %v642 = vadd.f32 %v516, %v615
  %v643 = vadd.f32 %v519, %v615
  %v644 = vadd.f32 %v521, %v615
  %v645 = vadd.f32 %v524, %v615
  %v646 = vadd.f32 %v526, %v615
  %v647 = vadd.f32 %v529, %v615
  %v648 = vadd.f32 %v531, %v615
  %v649 = vadd.f32 %v534, %v615
  %v650 = vadd.f32 %v536, %v615
  %v651 = vadd.f32 %v539, %v615
  %v652 = vadd.f32 %v541, %v615
  %v653 = vadd.f32 %v544, %v615
  %v654 = vadd.f32 %v546, %v615
  %v655 = vadd.f32 %v549, %v615
  %v656 = vadd.f32 %v551, %v615
  %v657 = vadd.f32 %v554, %v615
  %v658 = vadd.f32 %v556, %v615
  %v659 = vadd.f32 %v559, %v615
  %v660 = vadd.f32 %v561, %v615
  %v661 = vadd.f32 %v564, %v615
  %v662 = vadd.f32 %v566, %v615
  %v663 = vadd.f32 %v569, %v615
  %v664 = vadd.f32 %v571, %v615
  %v665 = vadd.f32 %v574, %v615
  %v666 = vadd.f32 %v576, %v615
  %v667 = vadd.f32 %v579, %v615
  %v668 = vadd.f32 %v581, %v615
  %v669 = vadd.f32 %v584, %v615
  %v670 = vadd.f32 %v586, %v615
  %v671 = vadd.f32 %v589, %v615
  %v672 = vadd.f32 %v591, %v615
  %v673 = vadd.f32 %v594, %v615
  %v674 = vadd.f32 %v596, %v615
  %v675 = vadd.f32 %v599, %v615
  %v676 = vadd.f32 %v601, %v615
  %v677 = vadd.f32 %v604, %v615
  %v678 = vadd.f32 %v606, %v615
  %v679 = vadd.f32 %v609, %v615
  %v680 = vadd.f32 %v611, %v615
  %v681 = vmax.f32 %v617, 0.0
  %v682 = vmax.f32 %v618, 0.0
  %v683 = vmax.f32 %v619, 0.0
  %v684 = vmax.f32 %v620, 0.0
  %v685 = vmax.f32 %v621, 0.0
  %v686 = vmax.f32 %v622, 0.0
  %v687 = vmax.f32 %v623, 0.0
  %v688 = vmax.f32 %v624, 0.0
  %v689 = vmax.f32 %v625, 0.0
  %v690 = vmax.f32 %v626, 0.0
  %v691 = vmax.f32 %v627, 0.0
  %v692 = vmax.f32 %v628, 0.0
  %v693 = vmax.f32 %v629, 0.0
  %v694 = vmax.f32 %v630, 0.0
  %v695 = vmax.f32 %v631, 0.0
  %v696 = vmax.f32 %v632, 0.0
  %v697 = vmax.f32 %v633, 0.0
  %v698 = vmax.f32 %v634, 0.0
  %v699 = vmax.f32 %v635, 0.0
  %v700 = vmax.f32 %v636, 0.0
  %v701 = vmax.f32 %v637, 0.0
  %v702 = vmax.f32 %v638, 0.0
  %v703 = vmax.f32 %v639, 0.0
  %v704 = vmax.f32 %v640, 0.0
  %v705 = vmax.f32 %v641, 0.0
  %v706 = vmax.f32 %v642, 0.0
  %v707 = vmax.f32 %v643, 0.0
  %v708 = vmax.f32 %v644, 0.0
  %v709 = vmax.f32 %v645, 0.0
  %v710 = vmax.f32 %v646, 0.0
  %v711 = vmax.f32 %v647, 0.0
  %v712 = vmax.f32 %v648, 0.0
  %v713 = vmax.f32 %v649, 0.0
  %v714 = vmax.f32 %v650, 0.0
  %v715 = vmax.f32 %v651, 0.0
  %v716 = vmax.f32 %v652, 0.0
  %v717 = vmax.f32 %v653, 0.0
  %v718 = vmax.f32 %v654, 0.0
  %v719 = vmax.f32 %v655, 0.0
  %v720 = vmax.f32 %v656, 0.0
  %v721 = vmax.f32 %v657, 0.0
  %v722 = vmax.f32 %v658, 0.0
  %v723 = vmax.f32 %v659, 0.0
  %v724 = vmax.f32 %v660, 0.0
  %v725 = vmax.f32 %v661, 0.0
  %v726 = vmax.f32 %v662, 0.0
  %v727 = vmax.f32 %v663, 0.0
  %v728 = vmax.f32 %v664, 0.0
  %v729 = vmax.f32 %v665, 0.0
  %v730 = vmax.f32 %v666, 0.0
  %v731 = vmax.f32 %v667, 0.0
  %v732 = vmax.f32 %v668, 0.0
  %v733 = vmax.f32 %v669, 0.0
  %v734 = vmax.f32 %v670, 0.0
  %v735 = vmax.f32 %v671, 0.0
  %v736 = vmax.f32 %v672, 0.0
  %v737 = vmax.f32 %v673, 0.0
  %v738 = vmax.f32 %v674, 0.0
  %v739 = vmax.f32 %v675, 0.0
  %v740 = vmax.f32 %v676, 0.0
  %v741 = vmax.f32 %v677, 0.0
  %v742 = vmax.f32 %v678, 0.0
  %v743 = vmax.f32 %v679, 0.0
  %v744 = vmax.f32 %v680, 0.0
  %v745 = vmul.f32 %v454, %v454
  %v746 = vmul.f32 %v456, %v456
  %v747 = vmul.f32 %v459, %v459
  %v748 = vmul.f32 %v461, %v461
  %v749 = vmul.f32 %v464, %v464
  %v750 = vmul.f32 %v466, %v466
  %v751 = vmul.f32 %v469, %v469
  %v752 = vmul.f32 %v471, %v471
  %v753 = vmul.f32 %v474, %v474
  %v754 = vmul.f32 %v476, %v476
  %v755 = vmul.f32 %v479, %v479
  %v756 = vmul.f32 %v481, %v481
  %v757 = vmul.f32 %v484, %v484
  %v758 = vmul.f32 %v486, %v486
  %v759 = vmul.f32 %v489, %v489
  %v760 = vmul.f32 %v491, %v491
  %v761 = vmul.f32 %v494, %v494
  %v762 = vmul.f32 %v496, %v496
  %v763 = vmul.f32 %v499, %v499
  %v764 = vmul.f32 %v501, %v501
  %v765 = vmul.f32 %v504, %v504
  %v766 = vmul.f32 %v506, %v506
  %v767 = vmul.f32 %v509, %v509
  %v768 = vmul.f32 %v511, %v511
  %v769 = vmul.f32 %v514, %v514
  %v770 = vmul.f32 %v516, %v516
  %v771 = vmul.f32 %v519, %v519
  %v772 = vmul.f32 %v521, %v521
  %v773 = vmul.f32 %v524, %v524
  %v774 = vmul.f32 %v526, %v526
  %v775 = vmul.f32 %v529, %v529
  %v776 = vmul.f32 %v531, %v531
  %v777 = vmul.f32 %v534, %v534
  %v778 = vmul.f32 %v536, %v536
  %v779 = vmul.f32 %v539, %v539
  %v780 = vmul.f32 %v541, %v541
  %v781 = vmul.f32 %v544, %v544
  %v782 = vmul.f32 %v546, %v546
  %v783 = vmul.f32 %v549, %v549
  %v784 = vmul.f32 %v551, %v551
  %v785 = vmul.f32 %v554, %v554
  %v786 = vmul.f32 %v556, %v556
  %v787 = vmul.f32 %v559, %v559
  %v788 = vmul.f32 %v561, %v561
  %v789 = vmul.f32 %v564, %v564
  %v790 = vmul.f32 %v566, %v566
  %v791 = vmul.f32 %v569, %v569
  %v792 = vmul.f32 %v571, %v571
  %v793 = vmul.f32 %v574, %v574
  %v794 = vmul.f32 %v576, %v576
  %v795 = vmul.f32 %v579, %v579
  %v796 = vmul.f32 %v581, %v581
  %v797 = vmul.f32 %v584, %v584
  %v798 = vmul.f32 %v586, %v586
  %v799 = vmul.f32 %v589, %v589
  %v800 = vmul.f32 %v591, %v591
  %v801 = vmul.f32 %v594, %v594
  %v802 = vmul.f32 %v596, %v596
  %v803 = vmul.f32 %v599, %v599
  %v804 = vmul.f32 %v601, %v601
  %v805 = vmul.f32 %v604, %v604
  %v806 = vmul.f32 %v606, %v606
  %v807 = vmul.f32 %v609, %v609
  %v808 = vmul.f32 %v611, %v611
  %873 = vrot.lane.b32.xlu0 %v745, 96
  %v874 = vpop.permute.xlu0 %873
  %875 = vrot.lane.b32.xlu0 %v746, 96
  %v876 = vpop.permute.xlu0 %875
  %877 = vrot.lane.b32.xlu0 %v747, 96
  %v878 = vpop.permute.xlu0 %877
  %879 = vrot.lane.b32.xlu0 %v748, 96
  %v880 = vpop.permute.xlu0 %879
  %881 = vrot.lane.b32.xlu0 %v749, 96
  %v882 = vpop.permute.xlu0 %881
  %883 = vrot.lane.b32.xlu0 %v750, 96
  %v884 = vpop.permute.xlu0 %883
  %885 = vrot.lane.b32.xlu0 %v751, 96
  %v886 = vpop.permute.xlu0 %885
  %887 = vrot.lane.b32.xlu0 %v752, 96
  %v888 = vpop.permute.xlu0 %887
  %889 = vrot.lane.b32.xlu0 %v753, 96
  %v890 = vpop.permute.xlu0 %889
  %891 = vrot.lane.b32.xlu0 %v754, 96
  %v892 = vpop.permute.xlu0 %891
  %893 = vrot.lane.b32.xlu0 %v755, 96
  %v894 = vpop.permute.xlu0 %893
  %895 = vrot.lane.b32.xlu0 %v756, 96
  %v896 = vpop.permute.xlu0 %895
  %897 = vrot.lane.b32.xlu0 %v757, 96
  %v898 = vpop.permute.xlu0 %897
  %899 = vrot.lane.b32.xlu0 %v758, 96
  %v900 = vpop.permute.xlu0 %899
  %901 = vrot.lane.b32.xlu0 %v759, 96
  %v902 = vpop.permute.xlu0 %901
  %903 = vrot.lane.b32.xlu0 %v760, 96
  %v904 = vpop.permute.xlu0 %903
  %905 = vrot.lane.b32.xlu0 %v761, 96
  %v906 = vpop.permute.xlu0 %905
  %907 = vrot.lane.b32.xlu0 %v762, 96
  %v908 = vpop.permute.xlu0 %907
  %909 = vrot.lane.b32.xlu0 %v763, 96
  %v910 = vpop.permute.xlu0 %909
  %911 = vrot.lane.b32.xlu0 %v764, 96
  %v912 = vpop.permute.xlu0 %911
  %913 = vrot.lane.b32.xlu0 %v765, 96
  %v914 = vpop.permute.xlu0 %913
  %915 = vrot.lane.b32.xlu0 %v766, 96
  %v916 = vpop.permute.xlu0 %915
  %917 = vrot.lane.b32.xlu0 %v767, 96
  %v918 = vpop.permute.xlu0 %917
  %919 = vrot.lane.b32.xlu0 %v768, 96
  %v920 = vpop.permute.xlu0 %919
  %921 = vrot.lane.b32.xlu0 %v769, 96
  %v922 = vpop.permute.xlu0 %921
  %923 = vrot.lane.b32.xlu0 %v770, 96
  %v924 = vpop.permute.xlu0 %923
  %925 = vrot.lane.b32.xlu0 %v771, 96
  %v926 = vpop.permute.xlu0 %925
  %927 = vrot.lane.b32.xlu0 %v772, 96
  %v928 = vpop.permute.xlu0 %927
  %929 = vrot.lane.b32.xlu0 %v773, 96
  %v930 = vpop.permute.xlu0 %929
  %931 = vrot.lane.b32.xlu0 %v774, 96
  %v932 = vpop.permute.xlu0 %931
  %933 = vrot.lane.b32.xlu0 %v775, 96
  %v934 = vpop.permute.xlu0 %933
  %935 = vrot.lane.b32.xlu0 %v776, 96
  %v936 = vpop.permute.xlu0 %935
  %937 = vrot.lane.b32.xlu0 %v777, 96
  %v938 = vpop.permute.xlu0 %937
  %939 = vrot.lane.b32.xlu0 %v778, 96
  %v940 = vpop.permute.xlu0 %939
  %941 = vrot.lane.b32.xlu0 %v779, 96
  %v942 = vpop.permute.xlu0 %941
  %943 = vrot.lane.b32.xlu0 %v780, 96
  %v944 = vpop.permute.xlu0 %943
  %945 = vrot.lane.b32.xlu0 %v781, 96
  %v946 = vpop.permute.xlu0 %945
  %947 = vrot.lane.b32.xlu0 %v782, 96
  %v948 = vpop.permute.xlu0 %947
  %949 = vrot.lane.b32.xlu0 %v783, 96
  %v950 = vpop.permute.xlu0 %949
  %951 = vrot.lane.b32.xlu0 %v784, 96
  %v952 = vpop.permute.xlu0 %951
  %953 = vrot.lane.b32.xlu0 %v785, 96
  %v954 = vpop.permute.xlu0 %953
  %955 = vrot.lane.b32.xlu0 %v786, 96
  %v956 = vpop.permute.xlu0 %955
  %957 = vrot.lane.b32.xlu0 %v787, 96
  %v958 = vpop.permute.xlu0 %957
  %959 = vrot.lane.b32.xlu0 %v788, 96
  %v960 = vpop.permute.xlu0 %959
  %961 = vrot.lane.b32.xlu0 %v789, 96
  %v962 = vpop.permute.xlu0 %961
  %963 = vrot.lane.b32.xlu0 %v790, 96
  %v964 = vpop.permute.xlu0 %963
  %965 = vrot.lane.b32.xlu0 %v791, 96
  %v966 = vpop.permute.xlu0 %965
  %967 = vrot.lane.b32.xlu0 %v792, 96
  %v968 = vpop.permute.xlu0 %967
  %969 = vrot.lane.b32.xlu0 %v793, 96
  %v970 = vpop.permute.xlu0 %969
  %971 = vrot.lane.b32.xlu0 %v794, 96
  %v972 = vpop.permute.xlu0 %971
  %973 = vrot.lane.b32.xlu0 %v795, 96
  %v974 = vpop.permute.xlu0 %973
  %975 = vrot.lane.b32.xlu0 %v796, 96
  %v976 = vpop.permute.xlu0 %975
  %977 = vrot.lane.b32.xlu0 %v797, 96
  %v978 = vpop.permute.xlu0 %977
  %979 = vrot.lane.b32.xlu0 %v798, 96
  %v980 = vpop.permute.xlu0 %979
  %981 = vrot.lane.b32.xlu0 %v799, 96
  %v982 = vpop.permute.xlu0 %981
  %983 = vrot.lane.b32.xlu0 %v800, 96
  %v984 = vpop.permute.xlu0 %983
  %985 = vrot.lane.b32.xlu0 %v801, 96
  %v986 = vpop.permute.xlu0 %985
  %987 = vrot.lane.b32.xlu0 %v802, 96
  %v988 = vpop.permute.xlu0 %987
  %989 = vrot.lane.b32.xlu0 %v803, 96
  %v990 = vpop.permute.xlu0 %989
  %991 = vrot.lane.b32.xlu0 %v804, 96
  %v992 = vpop.permute.xlu0 %991
  %993 = vrot.lane.b32.xlu0 %v805, 96
  %v994 = vpop.permute.xlu0 %993
  %995 = vrot.lane.b32.xlu0 %v806, 96
  %v996 = vpop.permute.xlu0 %995
  %997 = vrot.lane.b32.xlu0 %v807, 96
  %v998 = vpop.permute.xlu0 %997
  %999 = vrot.lane.b32.xlu0 %v808, 96
  %v1000 = vpop.permute.xlu0 %999
  %vm1065 = vcmask 64512
  %v1066 = vsel %vm1065, %v874, 0.0
  %1067 = vadd.xlane.f32.xlu0 %v1066
  %v1068 = vpop.xlane.xlu0 %1067
  %v1069 = vsel %vm1065, %v876, 0.0
  %1070 = vadd.xlane.f32.xlu0 %v1069
  %v1071 = vpop.xlane.xlu0 %1070
  %v1072 = vsel %vm1065, %v878, 0.0
  %1073 = vadd.xlane.f32.xlu0 %v1072
  %v1074 = vpop.xlane.xlu0 %1073
  %v1075 = vsel %vm1065, %v880, 0.0
  %1076 = vadd.xlane.f32.xlu0 %v1075
  %v1077 = vpop.xlane.xlu0 %1076
  %v1078 = vsel %vm1065, %v882, 0.0
  %1079 = vadd.xlane.f32.xlu0 %v1078
  %v1080 = vpop.xlane.xlu0 %1079
  %v1081 = vsel %vm1065, %v884, 0.0
  %1082 = vadd.xlane.f32.xlu0 %v1081
  %v1083 = vpop.xlane.xlu0 %1082
  %v1084 = vsel %vm1065, %v886, 0.0
  %1085 = vadd.xlane.f32.xlu0 %v1084
  %v1086 = vpop.xlane.xlu0 %1085
  %v1087 = vsel %vm1065, %v888, 0.0
  %1088 = vadd.xlane.f32.xlu0 %v1087
  %v1089 = vpop.xlane.xlu0 %1088
  %v1090 = vsel %vm1065, %v890, 0.0
  %1091 = vadd.xlane.f32.xlu0 %v1090
  %v1092 = vpop.xlane.xlu0 %1091
  %v1093 = vsel %vm1065, %v892, 0.0
  %1094 = vadd.xlane.f32.xlu0 %v1093
  %v1095 = vpop.xlane.xlu0 %1094
  %v1096 = vsel %vm1065, %v894, 0.0
  %1097 = vadd.xlane.f32.xlu0 %v1096
  %v1098 = vpop.xlane.xlu0 %1097
  %v1099 = vsel %vm1065, %v896, 0.0
  %1100 = vadd.xlane.f32.xlu0 %v1099
  %v1101 = vpop.xlane.xlu0 %1100
  %v1102 = vsel %vm1065, %v898, 0.0
  %1103 = vadd.xlane.f32.xlu0 %v1102
  %v1104 = vpop.xlane.xlu0 %1103
  %v1105 = vsel %vm1065, %v900, 0.0
  %1106 = vadd.xlane.f32.xlu0 %v1105
  %v1107 = vpop.xlane.xlu0 %1106
  %v1108 = vsel %vm1065, %v902, 0.0
  %1109 = vadd.xlane.f32.xlu0 %v1108
  %v1110 = vpop.xlane.xlu0 %1109
  %v1111 = vsel %vm1065, %v904, 0.0
  %1112 = vadd.xlane.f32.xlu0 %v1111
  %v1113 = vpop.xlane.xlu0 %1112
  %v1114 = vsel %vm1065, %v906, 0.0
  %1115 = vadd.xlane.f32.xlu0 %v1114
  %v1116 = vpop.xlane.xlu0 %1115
  %v1117 = vsel %vm1065, %v908, 0.0
  %1118 = vadd.xlane.f32.xlu0 %v1117
  %v1119 = vpop.xlane.xlu0 %1118
  %v1120 = vsel %vm1065, %v910, 0.0
  %1121 = vadd.xlane.f32.xlu0 %v1120
  %v1122 = vpop.xlane.xlu0 %1121
  %v1123 = vsel %vm1065, %v912, 0.0
  %1124 = vadd.xlane.f32.xlu0 %v1123
  %v1125 = vpop.xlane.xlu0 %1124
  %v1126 = vsel %vm1065, %v914, 0.0
  %1127 = vadd.xlane.f32.xlu0 %v1126
  %v1128 = vpop.xlane.xlu0 %1127
  %v1129 = vsel %vm1065, %v916, 0.0
  %1130 = vadd.xlane.f32.xlu0 %v1129
  %v1131 = vpop.xlane.xlu0 %1130
  %v1132 = vsel %vm1065, %v918, 0.0
  %1133 = vadd.xlane.f32.xlu0 %v1132
  %v1134 = vpop.xlane.xlu0 %1133
  %v1135 = vsel %vm1065, %v920, 0.0
  %1136 = vadd.xlane.f32.xlu0 %v1135
  %v1137 = vpop.xlane.xlu0 %1136
  %v1138 = vsel %vm1065, %v922, 0.0
  %1139 = vadd.xlane.f32.xlu0 %v1138
  %v1140 = vpop.xlane.xlu0 %1139
  %v1141 = vsel %vm1065, %v924, 0.0
  %1142 = vadd.xlane.f32.xlu0 %v1141
  %v1143 = vpop.xlane.xlu0 %1142
  %v1144 = vsel %vm1065, %v926, 0.0
  %1145 = vadd.xlane.f32.xlu0 %v1144
  %v1146 = vpop.xlane.xlu0 %1145
  %v1147 = vsel %vm1065, %v928, 0.0
  %1148 = vadd.xlane.f32.xlu0 %v1147
  %v1149 = vpop.xlane.xlu0 %1148
  %v1150 = vsel %vm1065, %v930, 0.0
  %1151 = vadd.xlane.f32.xlu0 %v1150
  %v1152 = vpop.xlane.xlu0 %1151
  %v1153 = vsel %vm1065, %v932, 0.0
  %1154 = vadd.xlane.f32.xlu0 %v1153
  %v1155 = vpop.xlane.xlu0 %1154
  %v1156 = vsel %vm1065, %v934, 0.0
  %1157 = vadd.xlane.f32.xlu0 %v1156
  %v1158 = vpop.xlane.xlu0 %1157
  %v1159 = vsel %vm1065, %v936, 0.0
  %1160 = vadd.xlane.f32.xlu0 %v1159
  %v1161 = vpop.xlane.xlu0 %1160
  %v1162 = vsel %vm1065, %v938, 0.0
  %1163 = vadd.xlane.f32.xlu0 %v1162
  %v1164 = vpop.xlane.xlu0 %1163
  %v1165 = vsel %vm1065, %v940, 0.0
  %1166 = vadd.xlane.f32.xlu0 %v1165
  %v1167 = vpop.xlane.xlu0 %1166
  %v1168 = vsel %vm1065, %v942, 0.0
  %1169 = vadd.xlane.f32.xlu0 %v1168
  %v1170 = vpop.xlane.xlu0 %1169
  %v1171 = vsel %vm1065, %v944, 0.0
  %1172 = vadd.xlane.f32.xlu0 %v1171
  %v1173 = vpop.xlane.xlu0 %1172
  %v1174 = vsel %vm1065, %v946, 0.0
  %1175 = vadd.xlane.f32.xlu0 %v1174
  %v1176 = vpop.xlane.xlu0 %1175
  %v1177 = vsel %vm1065, %v948, 0.0
  %1178 = vadd.xlane.f32.xlu0 %v1177
  %v1179 = vpop.xlane.xlu0 %1178
  %v1180 = vsel %vm1065, %v950, 0.0
  %1181 = vadd.xlane.f32.xlu0 %v1180
  %v1182 = vpop.xlane.xlu0 %1181
  %v1183 = vsel %vm1065, %v952, 0.0
  %1184 = vadd.xlane.f32.xlu0 %v1183
  %v1185 = vpop.xlane.xlu0 %1184
  %v1186 = vsel %vm1065, %v954, 0.0
  %1187 = vadd.xlane.f32.xlu0 %v1186
  %v1188 = vpop.xlane.xlu0 %1187
  %v1189 = vsel %vm1065, %v956, 0.0
  %1190 = vadd.xlane.f32.xlu0 %v1189
  %v1191 = vpop.xlane.xlu0 %1190
  %v1192 = vsel %vm1065, %v958, 0.0
  %1193 = vadd.xlane.f32.xlu0 %v1192
  %v1194 = vpop.xlane.xlu0 %1193
  %v1195 = vsel %vm1065, %v960, 0.0
  %1196 = vadd.xlane.f32.xlu0 %v1195
  %v1197 = vpop.xlane.xlu0 %1196
  %v1198 = vsel %vm1065, %v962, 0.0
  %1199 = vadd.xlane.f32.xlu0 %v1198
  %v1200 = vpop.xlane.xlu0 %1199
  %v1201 = vsel %vm1065, %v964, 0.0
  %1202 = vadd.xlane.f32.xlu0 %v1201
  %v1203 = vpop.xlane.xlu0 %1202
  %v1204 = vsel %vm1065, %v966, 0.0
  %1205 = vadd.xlane.f32.xlu0 %v1204
  %v1206 = vpop.xlane.xlu0 %1205
  %v1207 = vsel %vm1065, %v968, 0.0
  %1208 = vadd.xlane.f32.xlu0 %v1207
  %v1209 = vpop.xlane.xlu0 %1208
  %v1210 = vsel %vm1065, %v970, 0.0
  %1211 = vadd.xlane.f32.xlu0 %v1210
  %v1212 = vpop.xlane.xlu0 %1211
  %v1213 = vsel %vm1065, %v972, 0.0
  %1214 = vadd.xlane.f32.xlu0 %v1213
  %v1215 = vpop.xlane.xlu0 %1214
  %v1216 = vsel %vm1065, %v974, 0.0
  %1217 = vadd.xlane.f32.xlu0 %v1216
  %v1218 = vpop.xlane.xlu0 %1217
  %v1219 = vsel %vm1065, %v976, 0.0
  %1220 = vadd.xlane.f32.xlu0 %v1219
  %v1221 = vpop.xlane.xlu0 %1220
  %v1222 = vsel %vm1065, %v978, 0.0
  %1223 = vadd.xlane.f32.xlu0 %v1222
  %v1224 = vpop.xlane.xlu0 %1223
  %v1225 = vsel %vm1065, %v980, 0.0
  %1226 = vadd.xlane.f32.xlu0 %v1225
  %v1227 = vpop.xlane.xlu0 %1226
  %v1228 = vsel %vm1065, %v982, 0.0
  %1229 = vadd.xlane.f32.xlu0 %v1228
  %v1230 = vpop.xlane.xlu0 %1229
  %v1231 = vsel %vm1065, %v984, 0.0
  %1232 = vadd.xlane.f32.xlu0 %v1231
  %v1233 = vpop.xlane.xlu0 %1232
  %v1234 = vsel %vm1065, %v986, 0.0
  %1235 = vadd.xlane.f32.xlu0 %v1234
  %v1236 = vpop.xlane.xlu0 %1235
  %v1237 = vsel %vm1065, %v988, 0.0
  %1238 = vadd.xlane.f32.xlu0 %v1237
  %v1239 = vpop.xlane.xlu0 %1238
  %v1240 = vsel %vm1065, %v990, 0.0
  %1241 = vadd.xlane.f32.xlu0 %v1240
  %v1242 = vpop.xlane.xlu0 %1241
  %v1243 = vsel %vm1065, %v992, 0.0
  %1244 = vadd.xlane.f32.xlu0 %v1243
  %v1245 = vpop.xlane.xlu0 %1244
  %v1246 = vsel %vm1065, %v994, 0.0
  %1247 = vadd.xlane.f32.xlu0 %v1246
  %v1248 = vpop.xlane.xlu0 %1247
  %v1249 = vsel %vm1065, %v996, 0.0
  %1250 = vadd.xlane.f32.xlu0 %v1249
  %v1251 = vpop.xlane.xlu0 %1250
  %v1252 = vsel %vm1065, %v998, 0.0
  %1253 = vadd.xlane.f32.xlu0 %v1252
  %v1254 = vpop.xlane.xlu0 %1253
  %v1255 = vsel %vm1065, %v1000, 0.0
  %1256 = vadd.xlane.f32.xlu0 %v1255
  %v1257 = vpop.xlane.xlu0 %1256
  %v1258 = vmul.f32 %v91, %v91
  %v1259 = vmul.f32 %v92, %v92
  %v1260 = vmul.f32 %v93, %v93
  %v1261 = vmul.f32 %v94, %v94
  %v1262 = vmul.f32 %v95, %v95
  %v1263 = vmul.f32 %v96, %v96
  %v1264 = vmul.f32 %v97, %v97
  %v1265 = vmul.f32 %v98, %v98
  %v1266 = vmul.f32 %v99, %v99
  %v1267 = vmul.f32 %v100, %v100
  %v1268 = vmul.f32 %v101, %v101
  %v1269 = vmul.f32 %v102, %v102
  %v1270 = vmul.f32 %v103, %v103
  %v1271 = vmul.f32 %v104, %v104
  %v1272 = vmul.f32 %v105, %v105
  %v1273 = vmul.f32 %v106, %v106
  %v1274 = vmul.f32 %v107, %v107
  %v1275 = vmul.f32 %v108, %v108
  %v1276 = vmul.f32 %v109, %v109
  %v1277 = vmul.f32 %v110, %v110
  %v1278 = vmul.f32 %v111, %v111
  %v1279 = vmul.f32 %v112, %v112
  %v1280 = vmul.f32 %v113, %v113
  %v1281 = vmul.f32 %v114, %v114
  %v1282 = vmul.f32 %v115, %v115
  %v1283 = vmul.f32 %v116, %v116
  %v1284 = vmul.f32 %v117, %v117
  %v1285 = vmul.f32 %v118, %v118
  %v1286 = vmul.f32 %v119, %v119
  %v1287 = vmul.f32 %v120, %v120
  %v1288 = vmul.f32 %v121, %v121
  %v1289 = vmul.f32 %v122, %v122
  %v1290 = vmul.f32 %v123, %v123
  %v1291 = vmul.f32 %v124, %v124
  %v1292 = vmul.f32 %v125, %v125
  %v1293 = vmul.f32 %v126, %v126
  %v1294 = vmul.f32 %v127, %v127
  %v1295 = vmul.f32 %v128, %v128
  %v1296 = vmul.f32 %v129, %v129
  %v1297 = vmul.f32 %v130, %v130
  %v1298 = vmul.f32 %v131, %v131
  %v1299 = vmul.f32 %v132, %v132
  %v1300 = vmul.f32 %v133, %v133
  %v1301 = vmul.f32 %v134, %v134
  %v1302 = vmul.f32 %v135, %v135
  %v1303 = vmul.f32 %v136, %v136
  %v1304 = vmul.f32 %v137, %v137
  %v1305 = vmul.f32 %v138, %v138
  %v1306 = vmul.f32 %v139, %v139
  %v1307 = vmul.f32 %v140, %v140
  %v1308 = vmul.f32 %v141, %v141
  %v1309 = vmul.f32 %v142, %v142
  %v1310 = vmul.f32 %v143, %v143
  %v1311 = vmul.f32 %v144, %v144
  %v1312 = vmul.f32 %v145, %v145
  %v1313 = vmul.f32 %v146, %v146
  %v1314 = vmul.f32 %v147, %v147
  %v1315 = vmul.f32 %v148, %v148
  %v1316 = vmul.f32 %v149, %v149
  %v1317 = vmul.f32 %v150, %v150
  %v1318 = vmul.f32 %v151, %v151
  %v1319 = vmul.f32 %v152, %v152
  %v1320 = vmul.f32 %v153, %v153
  %v1321 = vmul.f32 %v154, %v154
  %v1322 = vsel %vm347, %v1258, 0.0
  %1323 = vadd.xlane.f32.xlu0 %v1322
  %v1324 = vpop.xlane.xlu0 %1323
  %v1325 = vsel %vm347, %v1259, 0.0
  %1326 = vadd.xlane.f32.xlu0 %v1325
  %v1327 = vpop.xlane.xlu0 %1326
  %v1328 = vsel %vm347, %v1260, 0.0
  %1329 = vadd.xlane.f32.xlu0 %v1328
  %v1330 = vpop.xlane.xlu0 %1329
  %v1331 = vsel %vm347, %v1261, 0.0
  %1332 = vadd.xlane.f32.xlu0 %v1331
  %v1333 = vpop.xlane.xlu0 %1332
  %v1334 = vsel %vm347, %v1262, 0.0
  %1335 = vadd.xlane.f32.xlu0 %v1334
  %v1336 = vpop.xlane.xlu0 %1335
  %v1337 = vsel %vm347, %v1263, 0.0
  %1338 = vadd.xlane.f32.xlu0 %v1337
  %v1339 = vpop.xlane.xlu0 %1338
  %v1340 = vsel %vm347, %v1264, 0.0
  %1341 = vadd.xlane.f32.xlu0 %v1340
  %v1342 = vpop.xlane.xlu0 %1341
  %v1343 = vsel %vm347, %v1265, 0.0
  %1344 = vadd.xlane.f32.xlu0 %v1343
  %v1345 = vpop.xlane.xlu0 %1344
  %v1346 = vsel %vm347, %v1266, 0.0
  %1347 = vadd.xlane.f32.xlu0 %v1346
  %v1348 = vpop.xlane.xlu0 %1347
  %v1349 = vsel %vm347, %v1267, 0.0
  %1350 = vadd.xlane.f32.xlu0 %v1349
  %v1351 = vpop.xlane.xlu0 %1350
  %v1352 = vsel %vm347, %v1268, 0.0
  %1353 = vadd.xlane.f32.xlu0 %v1352
  %v1354 = vpop.xlane.xlu0 %1353
  %v1355 = vsel %vm347, %v1269, 0.0
  %1356 = vadd.xlane.f32.xlu0 %v1355
  %v1357 = vpop.xlane.xlu0 %1356
  %v1358 = vsel %vm347, %v1270, 0.0
  %1359 = vadd.xlane.f32.xlu0 %v1358
  %v1360 = vpop.xlane.xlu0 %1359
  %v1361 = vsel %vm347, %v1271, 0.0
  %1362 = vadd.xlane.f32.xlu0 %v1361
  %v1363 = vpop.xlane.xlu0 %1362
  %v1364 = vsel %vm347, %v1272, 0.0
  %1365 = vadd.xlane.f32.xlu0 %v1364
  %v1366 = vpop.xlane.xlu0 %1365
  %v1367 = vsel %vm347, %v1273, 0.0
  %1368 = vadd.xlane.f32.xlu0 %v1367
  %v1369 = vpop.xlane.xlu0 %1368
  %v1370 = vsel %vm347, %v1274, 0.0
  %1371 = vadd.xlane.f32.xlu0 %v1370
  %v1372 = vpop.xlane.xlu0 %1371
  %v1373 = vsel %vm347, %v1275, 0.0
  %1374 = vadd.xlane.f32.xlu0 %v1373
  %v1375 = vpop.xlane.xlu0 %1374
  %v1376 = vsel %vm347, %v1276, 0.0
  %1377 = vadd.xlane.f32.xlu0 %v1376
  %v1378 = vpop.xlane.xlu0 %1377
  %v1379 = vsel %vm347, %v1277, 0.0
  %1380 = vadd.xlane.f32.xlu0 %v1379
  %v1381 = vpop.xlane.xlu0 %1380
  %v1382 = vsel %vm347, %v1278, 0.0
  %1383 = vadd.xlane.f32.xlu0 %v1382
  %v1384 = vpop.xlane.xlu0 %1383
  %v1385 = vsel %vm347, %v1279, 0.0
  %1386 = vadd.xlane.f32.xlu0 %v1385
  %v1387 = vpop.xlane.xlu0 %1386
  %v1388 = vsel %vm347, %v1280, 0.0
  %1389 = vadd.xlane.f32.xlu0 %v1388
  %v1390 = vpop.xlane.xlu0 %1389
  %v1391 = vsel %vm347, %v1281, 0.0
  %1392 = vadd.xlane.f32.xlu0 %v1391
  %v1393 = vpop.xlane.xlu0 %1392
  %v1394 = vsel %vm347, %v1282, 0.0
  %1395 = vadd.xlane.f32.xlu0 %v1394
  %v1396 = vpop.xlane.xlu0 %1395
  %v1397 = vsel %vm347, %v1283, 0.0
  %1398 = vadd.xlane.f32.xlu0 %v1397
  %v1399 = vpop.xlane.xlu0 %1398
  %v1400 = vsel %vm347, %v1284, 0.0
  %1401 = vadd.xlane.f32.xlu0 %v1400
  %v1402 = vpop.xlane.xlu0 %1401
  %v1403 = vsel %vm347, %v1285, 0.0
  %1404 = vadd.xlane.f32.xlu0 %v1403
  %v1405 = vpop.xlane.xlu0 %1404
  %v1406 = vsel %vm347, %v1286, 0.0
  %1407 = vadd.xlane.f32.xlu0 %v1406
  %v1408 = vpop.xlane.xlu0 %1407
  %v1409 = vsel %vm347, %v1287, 0.0
  %1410 = vadd.xlane.f32.xlu0 %v1409
  %v1411 = vpop.xlane.xlu0 %1410
  %v1412 = vsel %vm347, %v1288, 0.0
  %1413 = vadd.xlane.f32.xlu0 %v1412
  %v1414 = vpop.xlane.xlu0 %1413
  %v1415 = vsel %vm347, %v1289, 0.0
  %1416 = vadd.xlane.f32.xlu0 %v1415
  %v1417 = vpop.xlane.xlu0 %1416
  %v1418 = vsel %vm347, %v1290, 0.0
  %1419 = vadd.xlane.f32.xlu0 %v1418
  %v1420 = vpop.xlane.xlu0 %1419
  %v1421 = vsel %vm347, %v1291, 0.0
  %1422 = vadd.xlane.f32.xlu0 %v1421
  %v1423 = vpop.xlane.xlu0 %1422
  %v1424 = vsel %vm347, %v1292, 0.0
  %1425 = vadd.xlane.f32.xlu0 %v1424
  %v1426 = vpop.xlane.xlu0 %1425
  %v1427 = vsel %vm347, %v1293, 0.0
  %1428 = vadd.xlane.f32.xlu0 %v1427
  %v1429 = vpop.xlane.xlu0 %1428
  %v1430 = vsel %vm347, %v1294, 0.0
  %1431 = vadd.xlane.f32.xlu0 %v1430
  %v1432 = vpop.xlane.xlu0 %1431
  %v1433 = vsel %vm347, %v1295, 0.0
  %1434 = vadd.xlane.f32.xlu0 %v1433
  %v1435 = vpop.xlane.xlu0 %1434
  %v1436 = vsel %vm347, %v1296, 0.0
  %1437 = vadd.xlane.f32.xlu0 %v1436
  %v1438 = vpop.xlane.xlu0 %1437
  %v1439 = vsel %vm347, %v1297, 0.0
  %1440 = vadd.xlane.f32.xlu0 %v1439
  %v1441 = vpop.xlane.xlu0 %1440
  %v1442 = vsel %vm347, %v1298, 0.0
  %1443 = vadd.xlane.f32.xlu0 %v1442
  %v1444 = vpop.xlane.xlu0 %1443
  %v1445 = vsel %vm347, %v1299, 0.0
  %1446 = vadd.xlane.f32.xlu0 %v1445
  %v1447 = vpop.xlane.xlu0 %1446
  %v1448 = vsel %vm347, %v1300, 0.0
  %1449 = vadd.xlane.f32.xlu0 %v1448
  %v1450 = vpop.xlane.xlu0 %1449
  %v1451 = vsel %vm347, %v1301, 0.0
  %1452 = vadd.xlane.f32.xlu0 %v1451
  %v1453 = vpop.xlane.xlu0 %1452
  %v1454 = vsel %vm347, %v1302, 0.0
  %1455 = vadd.xlane.f32.xlu0 %v1454
  %v1456 = vpop.xlane.xlu0 %1455
  %v1457 = vsel %vm347, %v1303, 0.0
  %1458 = vadd.xlane.f32.xlu0 %v1457
  %v1459 = vpop.xlane.xlu0 %1458
  %v1460 = vsel %vm347, %v1304, 0.0
  %1461 = vadd.xlane.f32.xlu0 %v1460
  %v1462 = vpop.xlane.xlu0 %1461
  %v1463 = vsel %vm347, %v1305, 0.0
  %1464 = vadd.xlane.f32.xlu0 %v1463
  %v1465 = vpop.xlane.xlu0 %1464
  %v1466 = vsel %vm347, %v1306, 0.0
  %1467 = vadd.xlane.f32.xlu0 %v1466
  %v1468 = vpop.xlane.xlu0 %1467
  %v1469 = vsel %vm347, %v1307, 0.0
  %1470 = vadd.xlane.f32.xlu0 %v1469
  %v1471 = vpop.xlane.xlu0 %1470
  %v1472 = vsel %vm347, %v1308, 0.0
  %1473 = vadd.xlane.f32.xlu0 %v1472
  %v1474 = vpop.xlane.xlu0 %1473
  %v1475 = vsel %vm347, %v1309, 0.0
  %1476 = vadd.xlane.f32.xlu0 %v1475
  %v1477 = vpop.xlane.xlu0 %1476
  %v1478 = vsel %vm347, %v1310, 0.0
  %1479 = vadd.xlane.f32.xlu0 %v1478
  %v1480 = vpop.xlane.xlu0 %1479
  %v1481 = vsel %vm347, %v1311, 0.0
  %1482 = vadd.xlane.f32.xlu0 %v1481
  %v1483 = vpop.xlane.xlu0 %1482
  %v1484 = vsel %vm347, %v1312, 0.0
  %1485 = vadd.xlane.f32.xlu0 %v1484
  %v1486 = vpop.xlane.xlu0 %1485
  %v1487 = vsel %vm347, %v1313, 0.0
  %1488 = vadd.xlane.f32.xlu0 %v1487
  %v1489 = vpop.xlane.xlu0 %1488
  %v1490 = vsel %vm347, %v1314, 0.0
  %1491 = vadd.xlane.f32.xlu0 %v1490
  %v1492 = vpop.xlane.xlu0 %1491
  %v1493 = vsel %vm347, %v1315, 0.0
  %1494 = vadd.xlane.f32.xlu0 %v1493
  %v1495 = vpop.xlane.xlu0 %1494
  %v1496 = vsel %vm347, %v1316, 0.0
  %1497 = vadd.xlane.f32.xlu0 %v1496
  %v1498 = vpop.xlane.xlu0 %1497
  %v1499 = vsel %vm347, %v1317, 0.0
  %1500 = vadd.xlane.f32.xlu0 %v1499
  %v1501 = vpop.xlane.xlu0 %1500
  %v1502 = vsel %vm347, %v1318, 0.0
  %1503 = vadd.xlane.f32.xlu0 %v1502
  %v1504 = vpop.xlane.xlu0 %1503
  %v1505 = vsel %vm347, %v1319, 0.0
  %1506 = vadd.xlane.f32.xlu0 %v1505
  %v1507 = vpop.xlane.xlu0 %1506
  %v1508 = vsel %vm347, %v1320, 0.0
  %1509 = vadd.xlane.f32.xlu0 %v1508
  %v1510 = vpop.xlane.xlu0 %1509
  %v1511 = vsel %vm347, %v1321, 0.0
  %1512 = vadd.xlane.f32.xlu0 %v1511
  %v1513 = vpop.xlane.xlu0 %1512
  %v1514 = vsub.f32 %v1068, %v1324
  %v1515 = vsub.f32 %v1071, %v1327
  %v1516 = vsub.f32 %v1074, %v1330
  %v1517 = vsub.f32 %v1077, %v1333
  %v1518 = vsub.f32 %v1080, %v1336
  %v1519 = vsub.f32 %v1083, %v1339
  %v1520 = vsub.f32 %v1086, %v1342
  %v1521 = vsub.f32 %v1089, %v1345
  %v1522 = vsub.f32 %v1092, %v1348
  %v1523 = vsub.f32 %v1095, %v1351
  %v1524 = vsub.f32 %v1098, %v1354
  %v1525 = vsub.f32 %v1101, %v1357
  %v1526 = vsub.f32 %v1104, %v1360
  %v1527 = vsub.f32 %v1107, %v1363
  %v1528 = vsub.f32 %v1110, %v1366
  %v1529 = vsub.f32 %v1113, %v1369
  %v1530 = vsub.f32 %v1116, %v1372
  %v1531 = vsub.f32 %v1119, %v1375
  %v1532 = vsub.f32 %v1122, %v1378
  %v1533 = vsub.f32 %v1125, %v1381
  %v1534 = vsub.f32 %v1128, %v1384
  %v1535 = vsub.f32 %v1131, %v1387
  %v1536 = vsub.f32 %v1134, %v1390
  %v1537 = vsub.f32 %v1137, %v1393
  %v1538 = vsub.f32 %v1140, %v1396
  %v1539 = vsub.f32 %v1143, %v1399
  %v1540 = vsub.f32 %v1146, %v1402
  %v1541 = vsub.f32 %v1149, %v1405
  %v1542 = vsub.f32 %v1152, %v1408
  %v1543 = vsub.f32 %v1155, %v1411
  %v1544 = vsub.f32 %v1158, %v1414
  %v1545 = vsub.f32 %v1161, %v1417
  %v1546 = vsub.f32 %v1164, %v1420
  %v1547 = vsub.f32 %v1167, %v1423
  %v1548 = vsub.f32 %v1170, %v1426
  %v1549 = vsub.f32 %v1173, %v1429
  %v1550 = vsub.f32 %v1176, %v1432
  %v1551 = vsub.f32 %v1179, %v1435
  %v1552 = vsub.f32 %v1182, %v1438
  %v1553 = vsub.f32 %v1185, %v1441
  %v1554 = vsub.f32 %v1188, %v1444
  %v1555 = vsub.f32 %v1191, %v1447
  %v1556 = vsub.f32 %v1194, %v1450
  %v1557 = vsub.f32 %v1197, %v1453
  %v1558 = vsub.f32 %v1200, %v1456
  %v1559 = vsub.f32 %v1203, %v1459
  %v1560 = vsub.f32 %v1206, %v1462
  %v1561 = vsub.f32 %v1209, %v1465
  %v1562 = vsub.f32 %v1212, %v1468
  %v1563 = vsub.f32 %v1215, %v1471
  %v1564 = vsub.f32 %v1218, %v1474
  %v1565 = vsub.f32 %v1221, %v1477
  %v1566 = vsub.f32 %v1224, %v1480
  %v1567 = vsub.f32 %v1227, %v1483
  %v1568 = vsub.f32 %v1230, %v1486
  %v1569 = vsub.f32 %v1233, %v1489
  %v1570 = vsub.f32 %v1236, %v1492
  %v1571 = vsub.f32 %v1239, %v1495
  %v1572 = vsub.f32 %v1242, %v1498
  %v1573 = vsub.f32 %v1245, %v1501
  %v1574 = vsub.f32 %v1248, %v1504
  %v1575 = vsub.f32 %v1251, %v1507
  %v1576 = vsub.f32 %v1254, %v1510
  %v1577 = vsub.f32 %v1257, %v1513
  %v1578 = vmul.f32 %v1514, 0.5
  %v1579 = vmul.f32 %v1515, 0.5
  %v1580 = vmul.f32 %v1516, 0.5
  %v1581 = vmul.f32 %v1517, 0.5
  %v1582 = vmul.f32 %v1518, 0.5
  %v1583 = vmul.f32 %v1519, 0.5
  %v1584 = vmul.f32 %v1520, 0.5
  %v1585 = vmul.f32 %v1521, 0.5
  %v1586 = vmul.f32 %v1522, 0.5
  %v1587 = vmul.f32 %v1523, 0.5
  %v1588 = vmul.f32 %v1524, 0.5
  %v1589 = vmul.f32 %v1525, 0.5
  %v1590 = vmul.f32 %v1526, 0.5
  %v1591 = vmul.f32 %v1527, 0.5
  %v1592 = vmul.f32 %v1528, 0.5
  %v1593 = vmul.f32 %v1529, 0.5
  %v1594 = vmul.f32 %v1530, 0.5
  %v1595 = vmul.f32 %v1531, 0.5
  %v1596 = vmul.f32 %v1532, 0.5
  %v1597 = vmul.f32 %v1533, 0.5
  %v1598 = vmul.f32 %v1534, 0.5
  %v1599 = vmul.f32 %v1535, 0.5
  %v1600 = vmul.f32 %v1536, 0.5
  %v1601 = vmul.f32 %v1537, 0.5
  %v1602 = vmul.f32 %v1538, 0.5
  %v1603 = vmul.f32 %v1539, 0.5
  %v1604 = vmul.f32 %v1540, 0.5
  %v1605 = vmul.f32 %v1541, 0.5
  %v1606 = vmul.f32 %v1542, 0.5
  %v1607 = vmul.f32 %v1543, 0.5
  %v1608 = vmul.f32 %v1544, 0.5
  %v1609 = vmul.f32 %v1545, 0.5
  %v1610 = vmul.f32 %v1546, 0.5
  %v1611 = vmul.f32 %v1547, 0.5
  %v1612 = vmul.f32 %v1548, 0.5
  %v1613 = vmul.f32 %v1549, 0.5
  %v1614 = vmul.f32 %v1550, 0.5
  %v1615 = vmul.f32 %v1551, 0.5
  %v1616 = vmul.f32 %v1552, 0.5
  %v1617 = vmul.f32 %v1553, 0.5
  %v1618 = vmul.f32 %v1554, 0.5
  %v1619 = vmul.f32 %v1555, 0.5
  %v1620 = vmul.f32 %v1556, 0.5
  %v1621 = vmul.f32 %v1557, 0.5
  %v1622 = vmul.f32 %v1558, 0.5
  %v1623 = vmul.f32 %v1559, 0.5
  %v1624 = vmul.f32 %v1560, 0.5
  %v1625 = vmul.f32 %v1561, 0.5
  %v1626 = vmul.f32 %v1562, 0.5
  %v1627 = vmul.f32 %v1563, 0.5
  %v1628 = vmul.f32 %v1564, 0.5
  %v1629 = vmul.f32 %v1565, 0.5
  %v1630 = vmul.f32 %v1566, 0.5
  %v1631 = vmul.f32 %v1567, 0.5
  %v1632 = vmul.f32 %v1568, 0.5
  %v1633 = vmul.f32 %v1569, 0.5
  %v1634 = vmul.f32 %v1570, 0.5
  %v1635 = vmul.f32 %v1571, 0.5
  %v1636 = vmul.f32 %v1572, 0.5
  %v1637 = vmul.f32 %v1573, 0.5
  %v1638 = vmul.f32 %v1574, 0.5
  %v1639 = vmul.f32 %v1575, 0.5
  %v1640 = vmul.f32 %v1576, 0.5
  %v1641 = vmul.f32 %v1577, 0.5
  %v1642 = vpack.c.bf16 %v682, %v681
  %v1643 = vpack.c.bf16 %v684, %v683
  %v1644 = vpack.c.bf16 %v686, %v685
  %v1645 = vpack.c.bf16 %v688, %v687
  %v1646 = vpack.c.bf16 %v690, %v689
  %v1647 = vpack.c.bf16 %v692, %v691
  %v1648 = vpack.c.bf16 %v694, %v693
  %v1649 = vpack.c.bf16 %v696, %v695
  %v1650 = vpack.c.bf16 %v698, %v697
  %v1651 = vpack.c.bf16 %v700, %v699
  %v1652 = vpack.c.bf16 %v702, %v701
  %v1653 = vpack.c.bf16 %v704, %v703
  %v1654 = vpack.c.bf16 %v706, %v705
  %v1655 = vpack.c.bf16 %v708, %v707
  %v1656 = vpack.c.bf16 %v710, %v709
  %v1657 = vpack.c.bf16 %v712, %v711
  %v1658 = vpack.c.bf16 %v714, %v713
  %v1659 = vpack.c.bf16 %v716, %v715
  %v1660 = vpack.c.bf16 %v718, %v717
  %v1661 = vpack.c.bf16 %v720, %v719
  %v1662 = vpack.c.bf16 %v722, %v721
  %v1663 = vpack.c.bf16 %v724, %v723
  %v1664 = vpack.c.bf16 %v726, %v725
  %v1665 = vpack.c.bf16 %v728, %v727
  %v1666 = vpack.c.bf16 %v730, %v729
  %v1667 = vpack.c.bf16 %v732, %v731
  %v1668 = vpack.c.bf16 %v734, %v733
  %v1669 = vpack.c.bf16 %v736, %v735
  %v1670 = vpack.c.bf16 %v738, %v737
  %v1671 = vpack.c.bf16 %v740, %v739
  %v1672 = vpack.c.bf16 %v742, %v741
  %v1673 = vpack.c.bf16 %v744, %v743
  %v1674 = vld [vmem:[%s3] sm:$0xf]
  %v1675 = vld [vmem:[%s3 + $0x4] sm:$0xf]
  %v1676 = vld [vmem:[%s3 + $0x8] sm:$0xf]
  %v1677 = vld [vmem:[%s3 + $0xc] sm:$0xf]
  %v1678 = vld [vmem:[%s4] sm:$0x1]
  %v1680 = vperm.slane %v1678, 0
  %v1686 = vunpack.c.l.b16 %v1674
  %v1687 = vunpack.c.l.b16 %v1675
  %v1688 = vunpack.c.l.b16 %v1676
  %v1689 = vunpack.c.l.b16 %v1677
  %v1690 = vpack.c.b16 %v1687, %v1686
  %v1691 = vpack.c.b16 %v1689, %v1688
  %vm1694 = vcmask 261120
  %v1696 = vsel %vm1694, %v1642, 0
  %v1699 = vsel %vm1694, %v1643, 0
  %v1702 = vsel %vm1694, %v1644, 0
  %v1705 = vsel %vm1694, %v1645, 0
  %v1708 = vsel %vm1694, %v1646, 0
  %v1711 = vsel %vm1694, %v1647, 0
  %v1714 = vsel %vm1694, %v1648, 0
  %v1717 = vsel %vm1694, %v1649, 0
  %v1720 = vsel %vm1694, %v1650, 0
  %v1723 = vsel %vm1694, %v1651, 0
  %v1726 = vsel %vm1694, %v1652, 0
  %v1729 = vsel %vm1694, %v1653, 0
  %v1732 = vsel %vm1694, %v1654, 0
  %v1735 = vsel %vm1694, %v1655, 0
  %v1738 = vsel %vm1694, %v1656, 0
  %v1741 = vsel %vm1694, %v1657, 0
  %v1744 = vsel %vm1694, %v1658, 0
  %v1747 = vsel %vm1694, %v1659, 0
  %v1750 = vsel %vm1694, %v1660, 0
  %v1753 = vsel %vm1694, %v1661, 0
  %v1756 = vsel %vm1694, %v1662, 0
  %v1759 = vsel %vm1694, %v1663, 0
  %v1762 = vsel %vm1694, %v1664, 0
  %v1765 = vsel %vm1694, %v1665, 0
  %v1768 = vsel %vm1694, %v1666, 0
  %v1771 = vsel %vm1694, %v1667, 0
  %v1774 = vsel %vm1694, %v1668, 0
  %v1777 = vsel %vm1694, %v1669, 0
  %v1780 = vsel %vm1694, %v1670, 0
  %v1783 = vsel %vm1694, %v1671, 0
  %v1786 = vsel %vm1694, %v1672, 0
  %v1789 = vsel %vm1694, %v1673, 0
  %1791 = vmatpush.bf16.msra.mxu0 0
  %1792 = vmatpush.bf16.msra.mxu0 0
  %1793 = vmatpush.bf16.msra.mxu0 0
  %1794 = vmatpush.bf16.msra.mxu0 0
  %1795 = vmatpush.bf16.msra.mxu0 0
  %1796 = vmatpush.bf16.msra.mxu0 0
  %1797 = vmatpush.bf16.msra.mxu0 %v1691
  %1798 = vmatpush.bf16.msra.mxu0 %v1690
  %1799 = vmatmul.bf16.gmra.mxu0 %v1696
  %v1800 = vpop.f32.mrf.mxu0
  %v1801 = vadd.f32 %v1680, %v1800
  %v1802 = vpop.f32.mrf.mxu0
  %v1803 = vadd.f32 %v1680, %v1802
  %1804 = vmatmul.bf16.gmra.mxu0 %v1699
  %v1805 = vpop.f32.mrf.mxu0
  %v1806 = vadd.f32 %v1680, %v1805
  %v1807 = vpop.f32.mrf.mxu0
  %v1808 = vadd.f32 %v1680, %v1807
  %1809 = vmatmul.bf16.gmra.mxu0 %v1702
  %v1810 = vpop.f32.mrf.mxu0
  %v1811 = vadd.f32 %v1680, %v1810
  %v1812 = vpop.f32.mrf.mxu0
  %v1813 = vadd.f32 %v1680, %v1812
  %1814 = vmatmul.bf16.gmra.mxu0 %v1705
  %v1815 = vpop.f32.mrf.mxu0
  %v1816 = vadd.f32 %v1680, %v1815
  %v1817 = vpop.f32.mrf.mxu0
  %v1818 = vadd.f32 %v1680, %v1817
  %1819 = vmatmul.bf16.gmra.mxu0 %v1708
  %v1820 = vpop.f32.mrf.mxu0
  %v1821 = vadd.f32 %v1680, %v1820
  %v1822 = vpop.f32.mrf.mxu0
  %v1823 = vadd.f32 %v1680, %v1822
  %1824 = vmatmul.bf16.gmra.mxu0 %v1711
  %v1825 = vpop.f32.mrf.mxu0
  %v1826 = vadd.f32 %v1680, %v1825
  %v1827 = vpop.f32.mrf.mxu0
  %v1828 = vadd.f32 %v1680, %v1827
  %1829 = vmatmul.bf16.gmra.mxu0 %v1714
  %v1830 = vpop.f32.mrf.mxu0
  %v1831 = vadd.f32 %v1680, %v1830
  %v1832 = vpop.f32.mrf.mxu0
  %v1833 = vadd.f32 %v1680, %v1832
  %1834 = vmatmul.bf16.gmra.mxu0 %v1717
  %v1835 = vpop.f32.mrf.mxu0
  %v1836 = vadd.f32 %v1680, %v1835
  %v1837 = vpop.f32.mrf.mxu0
  %v1838 = vadd.f32 %v1680, %v1837
  %1839 = vmatmul.bf16.gmra.mxu0 %v1720
  %v1840 = vpop.f32.mrf.mxu0
  %v1841 = vadd.f32 %v1680, %v1840
  %v1842 = vpop.f32.mrf.mxu0
  %v1843 = vadd.f32 %v1680, %v1842
  %1844 = vmatmul.bf16.gmra.mxu0 %v1723
  %v1845 = vpop.f32.mrf.mxu0
  %v1846 = vadd.f32 %v1680, %v1845
  %v1847 = vpop.f32.mrf.mxu0
  %v1848 = vadd.f32 %v1680, %v1847
  %1849 = vmatmul.bf16.gmra.mxu0 %v1726
  %v1850 = vpop.f32.mrf.mxu0
  %v1851 = vadd.f32 %v1680, %v1850
  %v1852 = vpop.f32.mrf.mxu0
  %v1853 = vadd.f32 %v1680, %v1852
  %1854 = vmatmul.bf16.gmra.mxu0 %v1729
  %v1855 = vpop.f32.mrf.mxu0
  %v1856 = vadd.f32 %v1680, %v1855
  %v1857 = vpop.f32.mrf.mxu0
  %v1858 = vadd.f32 %v1680, %v1857
  %1859 = vmatmul.bf16.gmra.mxu0 %v1732
  %v1860 = vpop.f32.mrf.mxu0
  %v1861 = vadd.f32 %v1680, %v1860
  %v1862 = vpop.f32.mrf.mxu0
  %v1863 = vadd.f32 %v1680, %v1862
  %1864 = vmatmul.bf16.gmra.mxu0 %v1735
  %v1865 = vpop.f32.mrf.mxu0
  %v1866 = vadd.f32 %v1680, %v1865
  %v1867 = vpop.f32.mrf.mxu0
  %v1868 = vadd.f32 %v1680, %v1867
  %1869 = vmatmul.bf16.gmra.mxu0 %v1738
  %v1870 = vpop.f32.mrf.mxu0
  %v1871 = vadd.f32 %v1680, %v1870
  %v1872 = vpop.f32.mrf.mxu0
  %v1873 = vadd.f32 %v1680, %v1872
  %1874 = vmatmul.bf16.gmra.mxu0 %v1741
  %v1875 = vpop.f32.mrf.mxu0
  %v1876 = vadd.f32 %v1680, %v1875
  %v1877 = vpop.f32.mrf.mxu0
  %v1878 = vadd.f32 %v1680, %v1877
  %1879 = vmatmul.bf16.gmra.mxu0 %v1744
  %v1880 = vpop.f32.mrf.mxu0
  %v1881 = vadd.f32 %v1680, %v1880
  %v1882 = vpop.f32.mrf.mxu0
  %v1883 = vadd.f32 %v1680, %v1882
  %1884 = vmatmul.bf16.gmra.mxu0 %v1747
  %v1885 = vpop.f32.mrf.mxu0
  %v1886 = vadd.f32 %v1680, %v1885
  %v1887 = vpop.f32.mrf.mxu0
  %v1888 = vadd.f32 %v1680, %v1887
  %1889 = vmatmul.bf16.gmra.mxu0 %v1750
  %v1890 = vpop.f32.mrf.mxu0
  %v1891 = vadd.f32 %v1680, %v1890
  %v1892 = vpop.f32.mrf.mxu0
  %v1893 = vadd.f32 %v1680, %v1892
  %1894 = vmatmul.bf16.gmra.mxu0 %v1753
  %v1895 = vpop.f32.mrf.mxu0
  %v1896 = vadd.f32 %v1680, %v1895
  %v1897 = vpop.f32.mrf.mxu0
  %v1898 = vadd.f32 %v1680, %v1897
  %1899 = vmatmul.bf16.gmra.mxu0 %v1756
  %v1900 = vpop.f32.mrf.mxu0
  %v1901 = vadd.f32 %v1680, %v1900
  %v1902 = vpop.f32.mrf.mxu0
  %v1903 = vadd.f32 %v1680, %v1902
  %1904 = vmatmul.bf16.gmra.mxu0 %v1759
  %v1905 = vpop.f32.mrf.mxu0
  %v1906 = vadd.f32 %v1680, %v1905
  %v1907 = vpop.f32.mrf.mxu0
  %v1908 = vadd.f32 %v1680, %v1907
  %1909 = vmatmul.bf16.gmra.mxu0 %v1762
  %v1910 = vpop.f32.mrf.mxu0
  %v1911 = vadd.f32 %v1680, %v1910
  %v1912 = vpop.f32.mrf.mxu0
  %v1913 = vadd.f32 %v1680, %v1912
  %1914 = vmatmul.bf16.gmra.mxu0 %v1765
  %v1915 = vpop.f32.mrf.mxu0
  %v1916 = vadd.f32 %v1680, %v1915
  %v1917 = vpop.f32.mrf.mxu0
  %v1918 = vadd.f32 %v1680, %v1917
  %1919 = vmatmul.bf16.gmra.mxu0 %v1768
  %v1920 = vpop.f32.mrf.mxu0
  %v1921 = vadd.f32 %v1680, %v1920
  %v1922 = vpop.f32.mrf.mxu0
  %v1923 = vadd.f32 %v1680, %v1922
  %1924 = vmatmul.bf16.gmra.mxu0 %v1771
  %v1925 = vpop.f32.mrf.mxu0
  %v1926 = vadd.f32 %v1680, %v1925
  %v1927 = vpop.f32.mrf.mxu0
  %v1928 = vadd.f32 %v1680, %v1927
  %1929 = vmatmul.bf16.gmra.mxu0 %v1774
  %v1930 = vpop.f32.mrf.mxu0
  %v1931 = vadd.f32 %v1680, %v1930
  %v1932 = vpop.f32.mrf.mxu0
  %v1933 = vadd.f32 %v1680, %v1932
  %1934 = vmatmul.bf16.gmra.mxu0 %v1777
  %v1935 = vpop.f32.mrf.mxu0
  %v1936 = vadd.f32 %v1680, %v1935
  %v1937 = vpop.f32.mrf.mxu0
  %v1938 = vadd.f32 %v1680, %v1937
  %1939 = vmatmul.bf16.gmra.mxu0 %v1780
  %v1940 = vpop.f32.mrf.mxu0
  %v1941 = vadd.f32 %v1680, %v1940
  %v1942 = vpop.f32.mrf.mxu0
  %v1943 = vadd.f32 %v1680, %v1942
  %1944 = vmatmul.bf16.gmra.mxu0 %v1783
  %v1945 = vpop.f32.mrf.mxu0
  %v1946 = vadd.f32 %v1680, %v1945
  %v1947 = vpop.f32.mrf.mxu0
  %v1948 = vadd.f32 %v1680, %v1947
  %1949 = vmatmul.bf16.gmra.mxu0 %v1786
  %v1950 = vpop.f32.mrf.mxu0
  %v1951 = vadd.f32 %v1680, %v1950
  %v1952 = vpop.f32.mrf.mxu0
  %v1953 = vadd.f32 %v1680, %v1952
  %1954 = vmatmul.bf16.gmra.mxu0 %v1789
  %v1955 = vpop.f32.mrf.mxu0
  %v1956 = vadd.f32 %v1680, %v1955
  %v1957 = vpop.f32.mrf.mxu0
  %v1958 = vadd.f32 %v1680, %v1957
  %1959 = vdwg.mxu0
  %v1960 = vmax.f32 %v1801, 0.0
  %v1961 = vmax.f32 %v1803, 0.0
  %v1962 = vmax.f32 %v1806, 0.0
  %v1963 = vmax.f32 %v1808, 0.0
  %v1964 = vmax.f32 %v1811, 0.0
  %v1965 = vmax.f32 %v1813, 0.0
  %v1966 = vmax.f32 %v1816, 0.0
  %v1967 = vmax.f32 %v1818, 0.0
  %v1968 = vmax.f32 %v1821, 0.0
  %v1969 = vmax.f32 %v1823, 0.0
  %v1970 = vmax.f32 %v1826, 0.0
  %v1971 = vmax.f32 %v1828, 0.0
  %v1972 = vmax.f32 %v1831, 0.0
  %v1973 = vmax.f32 %v1833, 0.0
  %v1974 = vmax.f32 %v1836, 0.0
  %v1975 = vmax.f32 %v1838, 0.0
  %v1976 = vmax.f32 %v1841, 0.0
  %v1977 = vmax.f32 %v1843, 0.0
  %v1978 = vmax.f32 %v1846, 0.0
  %v1979 = vmax.f32 %v1848, 0.0
  %v1980 = vmax.f32 %v1851, 0.0
  %v1981 = vmax.f32 %v1853, 0.0
  %v1982 = vmax.f32 %v1856, 0.0
  %v1983 = vmax.f32 %v1858, 0.0
  %v1984 = vmax.f32 %v1861, 0.0
  %v1985 = vmax.f32 %v1863, 0.0
  %v1986 = vmax.f32 %v1866, 0.0
  %v1987 = vmax.f32 %v1868, 0.0
  %v1988 = vmax.f32 %v1871, 0.0
  %v1989 = vmax.f32 %v1873, 0.0
  %v1990 = vmax.f32 %v1876, 0.0
  %v1991 = vmax.f32 %v1878, 0.0
  %v1992 = vmax.f32 %v1881, 0.0
  %v1993 = vmax.f32 %v1883, 0.0
  %v1994 = vmax.f32 %v1886, 0.0
  %v1995 = vmax.f32 %v1888, 0.0
  %v1996 = vmax.f32 %v1891, 0.0
  %v1997 = vmax.f32 %v1893, 0.0
  %v1998 = vmax.f32 %v1896, 0.0
  %v1999 = vmax.f32 %v1898, 0.0
  %v2000 = vmax.f32 %v1901, 0.0
  %v2001 = vmax.f32 %v1903, 0.0
  %v2002 = vmax.f32 %v1906, 0.0
  %v2003 = vmax.f32 %v1908, 0.0
  %v2004 = vmax.f32 %v1911, 0.0
  %v2005 = vmax.f32 %v1913, 0.0
  %v2006 = vmax.f32 %v1916, 0.0
  %v2007 = vmax.f32 %v1918, 0.0
  %v2008 = vmax.f32 %v1921, 0.0
  %v2009 = vmax.f32 %v1923, 0.0
  %v2010 = vmax.f32 %v1926, 0.0
  %v2011 = vmax.f32 %v1928, 0.0
  %v2012 = vmax.f32 %v1931, 0.0
  %v2013 = vmax.f32 %v1933, 0.0
  %v2014 = vmax.f32 %v1936, 0.0
  %v2015 = vmax.f32 %v1938, 0.0
  %v2016 = vmax.f32 %v1941, 0.0
  %v2017 = vmax.f32 %v1943, 0.0
  %v2018 = vmax.f32 %v1946, 0.0
  %v2019 = vmax.f32 %v1948, 0.0
  %v2020 = vmax.f32 %v1951, 0.0
  %v2021 = vmax.f32 %v1953, 0.0
  %v2022 = vmax.f32 %v1956, 0.0
  %v2023 = vmax.f32 %v1958, 0.0
  %v2024 = vpack.c.bf16 %v1961, %v1960
  %v2025 = vpack.c.bf16 %v1963, %v1962
  %v2026 = vpack.c.bf16 %v1965, %v1964
  %v2027 = vpack.c.bf16 %v1967, %v1966
  %v2028 = vpack.c.bf16 %v1969, %v1968
  %v2029 = vpack.c.bf16 %v1971, %v1970
  %v2030 = vpack.c.bf16 %v1973, %v1972
  %v2031 = vpack.c.bf16 %v1975, %v1974
  %v2032 = vpack.c.bf16 %v1977, %v1976
  %v2033 = vpack.c.bf16 %v1979, %v1978
  %v2034 = vpack.c.bf16 %v1981, %v1980
  %v2035 = vpack.c.bf16 %v1983, %v1982
  %v2036 = vpack.c.bf16 %v1985, %v1984
  %v2037 = vpack.c.bf16 %v1987, %v1986
  %v2038 = vpack.c.bf16 %v1989, %v1988
  %v2039 = vpack.c.bf16 %v1991, %v1990
  %v2040 = vpack.c.bf16 %v1993, %v1992
  %v2041 = vpack.c.bf16 %v1995, %v1994
  %v2042 = vpack.c.bf16 %v1997, %v1996
  %v2043 = vpack.c.bf16 %v1999, %v1998
  %v2044 = vpack.c.bf16 %v2001, %v2000
  %v2045 = vpack.c.bf16 %v2003, %v2002
  %v2046 = vpack.c.bf16 %v2005, %v2004
  %v2047 = vpack.c.bf16 %v2007, %v2006
  %v2048 = vpack.c.bf16 %v2009, %v2008
  %v2049 = vpack.c.bf16 %v2011, %v2010
  %v2050 = vpack.c.bf16 %v2013, %v2012
  %v2051 = vpack.c.bf16 %v2015, %v2014
  %v2052 = vpack.c.bf16 %v2017, %v2016
  %v2053 = vpack.c.bf16 %v2019, %v2018
  %v2054 = vpack.c.bf16 %v2021, %v2020
  %v2055 = vpack.c.bf16 %v2023, %v2022
  %v2056 = vld [vmem:[%s5] sm:$0xf]
  %v2057 = vld [vmem:[%s5 + $0x4] sm:$0xf]
  %v2058 = vld [vmem:[%s6] sm:$0x1]
  %v2060 = vperm.slane %v2058, 0
  %v2064 = vunpack.c.l.b16 %v2056
  %v2065 = vunpack.c.l.b16 %v2057
  %v2066 = vpack.c.b16 %v2065, %v2064
  %vm2068 = vcmask 130048
  %v2070 = vsel %vm2068, %v2024, 0
  %v2073 = vsel %vm2068, %v2025, 0
  %v2076 = vsel %vm2068, %v2026, 0
  %v2079 = vsel %vm2068, %v2027, 0
  %v2082 = vsel %vm2068, %v2028, 0
  %v2085 = vsel %vm2068, %v2029, 0
  %v2088 = vsel %vm2068, %v2030, 0
  %v2091 = vsel %vm2068, %v2031, 0
  %v2094 = vsel %vm2068, %v2032, 0
  %v2097 = vsel %vm2068, %v2033, 0
  %v2100 = vsel %vm2068, %v2034, 0
  %v2103 = vsel %vm2068, %v2035, 0
  %v2106 = vsel %vm2068, %v2036, 0
  %v2109 = vsel %vm2068, %v2037, 0
  %v2112 = vsel %vm2068, %v2038, 0
  %v2115 = vsel %vm2068, %v2039, 0
  %v2118 = vsel %vm2068, %v2040, 0
  %v2121 = vsel %vm2068, %v2041, 0
  %v2124 = vsel %vm2068, %v2042, 0
  %v2127 = vsel %vm2068, %v2043, 0
  %v2130 = vsel %vm2068, %v2044, 0
  %v2133 = vsel %vm2068, %v2045, 0
  %v2136 = vsel %vm2068, %v2046, 0
  %v2139 = vsel %vm2068, %v2047, 0
  %v2142 = vsel %vm2068, %v2048, 0
  %v2145 = vsel %vm2068, %v2049, 0
  %v2148 = vsel %vm2068, %v2050, 0
  %v2151 = vsel %vm2068, %v2051, 0
  %v2154 = vsel %vm2068, %v2052, 0
  %v2157 = vsel %vm2068, %v2053, 0
  %v2160 = vsel %vm2068, %v2054, 0
  %v2163 = vsel %vm2068, %v2055, 0
  %2165 = vmatpush.bf16.msra.mxu0 0
  %2166 = vmatpush.bf16.msra.mxu0 0
  %2167 = vmatpush.bf16.msra.mxu0 0
  %2168 = vmatpush.bf16.msra.mxu0 0
  %2169 = vmatpush.bf16.msra.mxu0 0
  %2170 = vmatpush.bf16.msra.mxu0 0
  %2171 = vmatpush.bf16.msra.mxu0 0
  %2172 = vmatpush.bf16.msra.mxu0 %v2066
  %2173 = vmatmul.bf16.gmra.mxu0 %v2070
  %v2174 = vpop.f32.mrf.mxu0
  %v2175 = vadd.f32 %v2060, %v2174
  %v2176 = vpop.f32.mrf.mxu0
  %v2177 = vadd.f32 %v2060, %v2176
  %2178 = vmatmul.bf16.gmra.mxu0 %v2073
  %v2179 = vpop.f32.mrf.mxu0
  %v2180 = vadd.f32 %v2060, %v2179
  %v2181 = vpop.f32.mrf.mxu0
  %v2182 = vadd.f32 %v2060, %v2181
  %2183 = vmatmul.bf16.gmra.mxu0 %v2076
  %v2184 = vpop.f32.mrf.mxu0
  %v2185 = vadd.f32 %v2060, %v2184
  %v2186 = vpop.f32.mrf.mxu0
  %v2187 = vadd.f32 %v2060, %v2186
  %2188 = vmatmul.bf16.gmra.mxu0 %v2079
  %v2189 = vpop.f32.mrf.mxu0
  %v2190 = vadd.f32 %v2060, %v2189
  %v2191 = vpop.f32.mrf.mxu0
  %v2192 = vadd.f32 %v2060, %v2191
  %2193 = vmatmul.bf16.gmra.mxu0 %v2082
  %v2194 = vpop.f32.mrf.mxu0
  %v2195 = vadd.f32 %v2060, %v2194
  %v2196 = vpop.f32.mrf.mxu0
  %v2197 = vadd.f32 %v2060, %v2196
  %2198 = vmatmul.bf16.gmra.mxu0 %v2085
  %v2199 = vpop.f32.mrf.mxu0
  %v2200 = vadd.f32 %v2060, %v2199
  %v2201 = vpop.f32.mrf.mxu0
  %v2202 = vadd.f32 %v2060, %v2201
  %2203 = vmatmul.bf16.gmra.mxu0 %v2088
  %v2204 = vpop.f32.mrf.mxu0
  %v2205 = vadd.f32 %v2060, %v2204
  %v2206 = vpop.f32.mrf.mxu0
  %v2207 = vadd.f32 %v2060, %v2206
  %2208 = vmatmul.bf16.gmra.mxu0 %v2091
  %v2209 = vpop.f32.mrf.mxu0
  %v2210 = vadd.f32 %v2060, %v2209
  %v2211 = vpop.f32.mrf.mxu0
  %v2212 = vadd.f32 %v2060, %v2211
  %2213 = vmatmul.bf16.gmra.mxu0 %v2094
  %v2214 = vpop.f32.mrf.mxu0
  %v2215 = vadd.f32 %v2060, %v2214
  %v2216 = vpop.f32.mrf.mxu0
  %v2217 = vadd.f32 %v2060, %v2216
  %2218 = vmatmul.bf16.gmra.mxu0 %v2097
  %v2219 = vpop.f32.mrf.mxu0
  %v2220 = vadd.f32 %v2060, %v2219
  %v2221 = vpop.f32.mrf.mxu0
  %v2222 = vadd.f32 %v2060, %v2221
  %2223 = vmatmul.bf16.gmra.mxu0 %v2100
  %v2224 = vpop.f32.mrf.mxu0
  %v2225 = vadd.f32 %v2060, %v2224
  %v2226 = vpop.f32.mrf.mxu0
  %v2227 = vadd.f32 %v2060, %v2226
  %2228 = vmatmul.bf16.gmra.mxu0 %v2103
  %v2229 = vpop.f32.mrf.mxu0
  %v2230 = vadd.f32 %v2060, %v2229
  %v2231 = vpop.f32.mrf.mxu0
  %v2232 = vadd.f32 %v2060, %v2231
  %2233 = vmatmul.bf16.gmra.mxu0 %v2106
  %v2234 = vpop.f32.mrf.mxu0
  %v2235 = vadd.f32 %v2060, %v2234
  %v2236 = vpop.f32.mrf.mxu0
  %v2237 = vadd.f32 %v2060, %v2236
  %2238 = vmatmul.bf16.gmra.mxu0 %v2109
  %v2239 = vpop.f32.mrf.mxu0
  %v2240 = vadd.f32 %v2060, %v2239
  %v2241 = vpop.f32.mrf.mxu0
  %v2242 = vadd.f32 %v2060, %v2241
  %2243 = vmatmul.bf16.gmra.mxu0 %v2112
  %v2244 = vpop.f32.mrf.mxu0
  %v2245 = vadd.f32 %v2060, %v2244
  %v2246 = vpop.f32.mrf.mxu0
  %v2247 = vadd.f32 %v2060, %v2246
  %2248 = vmatmul.bf16.gmra.mxu0 %v2115
  %v2249 = vpop.f32.mrf.mxu0
  %v2250 = vadd.f32 %v2060, %v2249
  %v2251 = vpop.f32.mrf.mxu0
  %v2252 = vadd.f32 %v2060, %v2251
  %2253 = vmatmul.bf16.gmra.mxu0 %v2118
  %v2254 = vpop.f32.mrf.mxu0
  %v2255 = vadd.f32 %v2060, %v2254
  %v2256 = vpop.f32.mrf.mxu0
  %v2257 = vadd.f32 %v2060, %v2256
  %2258 = vmatmul.bf16.gmra.mxu0 %v2121
  %v2259 = vpop.f32.mrf.mxu0
  %v2260 = vadd.f32 %v2060, %v2259
  %v2261 = vpop.f32.mrf.mxu0
  %v2262 = vadd.f32 %v2060, %v2261
  %2263 = vmatmul.bf16.gmra.mxu0 %v2124
  %v2264 = vpop.f32.mrf.mxu0
  %v2265 = vadd.f32 %v2060, %v2264
  %v2266 = vpop.f32.mrf.mxu0
  %v2267 = vadd.f32 %v2060, %v2266
  %2268 = vmatmul.bf16.gmra.mxu0 %v2127
  %v2269 = vpop.f32.mrf.mxu0
  %v2270 = vadd.f32 %v2060, %v2269
  %v2271 = vpop.f32.mrf.mxu0
  %v2272 = vadd.f32 %v2060, %v2271
  %2273 = vmatmul.bf16.gmra.mxu0 %v2130
  %v2274 = vpop.f32.mrf.mxu0
  %v2275 = vadd.f32 %v2060, %v2274
  %v2276 = vpop.f32.mrf.mxu0
  %v2277 = vadd.f32 %v2060, %v2276
  %2278 = vmatmul.bf16.gmra.mxu0 %v2133
  %v2279 = vpop.f32.mrf.mxu0
  %v2280 = vadd.f32 %v2060, %v2279
  %v2281 = vpop.f32.mrf.mxu0
  %v2282 = vadd.f32 %v2060, %v2281
  %2283 = vmatmul.bf16.gmra.mxu0 %v2136
  %v2284 = vpop.f32.mrf.mxu0
  %v2285 = vadd.f32 %v2060, %v2284
  %v2286 = vpop.f32.mrf.mxu0
  %v2287 = vadd.f32 %v2060, %v2286
  %2288 = vmatmul.bf16.gmra.mxu0 %v2139
  %v2289 = vpop.f32.mrf.mxu0
  %v2290 = vadd.f32 %v2060, %v2289
  %v2291 = vpop.f32.mrf.mxu0
  %v2292 = vadd.f32 %v2060, %v2291
  %2293 = vmatmul.bf16.gmra.mxu0 %v2142
  %v2294 = vpop.f32.mrf.mxu0
  %v2295 = vadd.f32 %v2060, %v2294
  %v2296 = vpop.f32.mrf.mxu0
  %v2297 = vadd.f32 %v2060, %v2296
  %2298 = vmatmul.bf16.gmra.mxu0 %v2145
  %v2299 = vpop.f32.mrf.mxu0
  %v2300 = vadd.f32 %v2060, %v2299
  %v2301 = vpop.f32.mrf.mxu0
  %v2302 = vadd.f32 %v2060, %v2301
  %2303 = vmatmul.bf16.gmra.mxu0 %v2148
  %v2304 = vpop.f32.mrf.mxu0
  %v2305 = vadd.f32 %v2060, %v2304
  %v2306 = vpop.f32.mrf.mxu0
  %v2307 = vadd.f32 %v2060, %v2306
  %2308 = vmatmul.bf16.gmra.mxu0 %v2151
  %v2309 = vpop.f32.mrf.mxu0
  %v2310 = vadd.f32 %v2060, %v2309
  %v2311 = vpop.f32.mrf.mxu0
  %v2312 = vadd.f32 %v2060, %v2311
  %2313 = vmatmul.bf16.gmra.mxu0 %v2154
  %v2314 = vpop.f32.mrf.mxu0
  %v2315 = vadd.f32 %v2060, %v2314
  %v2316 = vpop.f32.mrf.mxu0
  %v2317 = vadd.f32 %v2060, %v2316
  %2318 = vmatmul.bf16.gmra.mxu0 %v2157
  %v2319 = vpop.f32.mrf.mxu0
  %v2320 = vadd.f32 %v2060, %v2319
  %v2321 = vpop.f32.mrf.mxu0
  %v2322 = vadd.f32 %v2060, %v2321
  %2323 = vmatmul.bf16.gmra.mxu0 %v2160
  %v2324 = vpop.f32.mrf.mxu0
  %v2325 = vadd.f32 %v2060, %v2324
  %v2326 = vpop.f32.mrf.mxu0
  %v2327 = vadd.f32 %v2060, %v2326
  %2328 = vmatmul.bf16.gmra.mxu0 %v2163
  %v2329 = vpop.f32.mrf.mxu0
  %v2330 = vadd.f32 %v2060, %v2329
  %v2331 = vpop.f32.mrf.mxu0
  %v2332 = vadd.f32 %v2060, %v2331
  %2333 = vdwg.mxu0
  %v2334 = vadd.f32 %v2175, %v1578
  %v2335 = vadd.f32 %v2177, %v1579
  %v2336 = vadd.f32 %v2180, %v1580
  %v2337 = vadd.f32 %v2182, %v1581
  %v2338 = vadd.f32 %v2185, %v1582
  %v2339 = vadd.f32 %v2187, %v1583
  %v2340 = vadd.f32 %v2190, %v1584
  %v2341 = vadd.f32 %v2192, %v1585
  %v2342 = vadd.f32 %v2195, %v1586
  %v2343 = vadd.f32 %v2197, %v1587
  %v2344 = vadd.f32 %v2200, %v1588
  %v2345 = vadd.f32 %v2202, %v1589
  %v2346 = vadd.f32 %v2205, %v1590
  %v2347 = vadd.f32 %v2207, %v1591
  %v2348 = vadd.f32 %v2210, %v1592
  %v2349 = vadd.f32 %v2212, %v1593
  %v2350 = vadd.f32 %v2215, %v1594
  %v2351 = vadd.f32 %v2217, %v1595
  %v2352 = vadd.f32 %v2220, %v1596
  %v2353 = vadd.f32 %v2222, %v1597
  %v2354 = vadd.f32 %v2225, %v1598
  %v2355 = vadd.f32 %v2227, %v1599
  %v2356 = vadd.f32 %v2230, %v1600
  %v2357 = vadd.f32 %v2232, %v1601
  %v2358 = vadd.f32 %v2235, %v1602
  %v2359 = vadd.f32 %v2237, %v1603
  %v2360 = vadd.f32 %v2240, %v1604
  %v2361 = vadd.f32 %v2242, %v1605
  %v2362 = vadd.f32 %v2245, %v1606
  %v2363 = vadd.f32 %v2247, %v1607
  %v2364 = vadd.f32 %v2250, %v1608
  %v2365 = vadd.f32 %v2252, %v1609
  %v2366 = vadd.f32 %v2255, %v1610
  %v2367 = vadd.f32 %v2257, %v1611
  %v2368 = vadd.f32 %v2260, %v1612
  %v2369 = vadd.f32 %v2262, %v1613
  %v2370 = vadd.f32 %v2265, %v1614
  %v2371 = vadd.f32 %v2267, %v1615
  %v2372 = vadd.f32 %v2270, %v1616
  %v2373 = vadd.f32 %v2272, %v1617
  %v2374 = vadd.f32 %v2275, %v1618
  %v2375 = vadd.f32 %v2277, %v1619
  %v2376 = vadd.f32 %v2280, %v1620
  %v2377 = vadd.f32 %v2282, %v1621
  %v2378 = vadd.f32 %v2285, %v1622
  %v2379 = vadd.f32 %v2287, %v1623
  %v2380 = vadd.f32 %v2290, %v1624
  %v2381 = vadd.f32 %v2292, %v1625
  %v2382 = vadd.f32 %v2295, %v1626
  %v2383 = vadd.f32 %v2297, %v1627
  %v2384 = vadd.f32 %v2300, %v1628
  %v2385 = vadd.f32 %v2302, %v1629
  %v2386 = vadd.f32 %v2305, %v1630
  %v2387 = vadd.f32 %v2307, %v1631
  %v2388 = vadd.f32 %v2310, %v1632
  %v2389 = vadd.f32 %v2312, %v1633
  %v2390 = vadd.f32 %v2315, %v1634
  %v2391 = vadd.f32 %v2317, %v1635
  %v2392 = vadd.f32 %v2320, %v1636
  %v2393 = vadd.f32 %v2322, %v1637
  %v2394 = vadd.f32 %v2325, %v1638
  %v2395 = vadd.f32 %v2327, %v1639
  %v2396 = vadd.f32 %v2330, %v1640
  %v2397 = vadd.f32 %v2332, %v1641
  %vm2398 = vcmask 31744
  %2399 = vst.msk [vmem:[%s7] sm:$0xff] %vm2398, %v2334
  %2400 = vst.msk [vmem:[%s7 + $0x8] sm:$0xff] %vm2398, %v2335
  %2401 = vst.msk [vmem:[%s7 + $0x10] sm:$0xff] %vm2398, %v2336
  %2402 = vst.msk [vmem:[%s7 + $0x18] sm:$0xff] %vm2398, %v2337
  %2403 = vst.msk [vmem:[%s7 + $0x20] sm:$0xff] %vm2398, %v2338
  %2404 = vst.msk [vmem:[%s7 + $0x28] sm:$0xff] %vm2398, %v2339
  %2405 = vst.msk [vmem:[%s7 + $0x30] sm:$0xff] %vm2398, %v2340
  %2406 = vst.msk [vmem:[%s7 + $0x38] sm:$0xff] %vm2398, %v2341
  %2407 = vst.msk [vmem:[%s7 + $0x40] sm:$0xff] %vm2398, %v2342
  %2408 = vst.msk [vmem:[%s7 + $0x48] sm:$0xff] %vm2398, %v2343
  %2409 = vst.msk [vmem:[%s7 + $0x50] sm:$0xff] %vm2398, %v2344
  %2410 = vst.msk [vmem:[%s7 + $0x58] sm:$0xff] %vm2398, %v2345
  %2411 = vst.msk [vmem:[%s7 + $0x60] sm:$0xff] %vm2398, %v2346
  %2412 = vst.msk [vmem:[%s7 + $0x68] sm:$0xff] %vm2398, %v2347
  %2413 = vst.msk [vmem:[%s7 + $0x70] sm:$0xff] %vm2398, %v2348
  %2414 = vst.msk [vmem:[%s7 + $0x78] sm:$0xff] %vm2398, %v2349
  %2415 = vst.msk [vmem:[%s7 + $0x80] sm:$0xff] %vm2398, %v2350
  %2416 = vst.msk [vmem:[%s7 + $0x88] sm:$0xff] %vm2398, %v2351
  %2417 = vst.msk [vmem:[%s7 + $0x90] sm:$0xff] %vm2398, %v2352
  %2418 = vst.msk [vmem:[%s7 + $0x98] sm:$0xff] %vm2398, %v2353
  %2419 = vst.msk [vmem:[%s7 + $0xa0] sm:$0xff] %vm2398, %v2354
  %2420 = vst.msk [vmem:[%s7 + $0xa8] sm:$0xff] %vm2398, %v2355
  %2421 = vst.msk [vmem:[%s7 + $0xb0] sm:$0xff] %vm2398, %v2356
  %2422 = vst.msk [vmem:[%s7 + $0xb8] sm:$0xff] %vm2398, %v2357
  %2423 = vst.msk [vmem:[%s7 + $0xc0] sm:$0xff] %vm2398, %v2358
  %2424 = vst.msk [vmem:[%s7 + $0xc8] sm:$0xff] %vm2398, %v2359
  %2425 = vst.msk [vmem:[%s7 + $0xd0] sm:$0xff] %vm2398, %v2360
  %2426 = vst.msk [vmem:[%s7 + $0xd8] sm:$0xff] %vm2398, %v2361
  %2427 = vst.msk [vmem:[%s7 + $0xe0] sm:$0xff] %vm2398, %v2362
  %2428 = vst.msk [vmem:[%s7 + $0xe8] sm:$0xff] %vm2398, %v2363
  %2429 = vst.msk [vmem:[%s7 + $0xf0] sm:$0xff] %vm2398, %v2364
  %2430 = vst.msk [vmem:[%s7 + $0xf8] sm:$0xff] %vm2398, %v2365
  %2431 = vst.msk [vmem:[%s7 + $0x100] sm:$0xff] %vm2398, %v2366
  %2432 = vst.msk [vmem:[%s7 + $0x108] sm:$0xff] %vm2398, %v2367
  %2433 = vst.msk [vmem:[%s7 + $0x110] sm:$0xff] %vm2398, %v2368
  %2434 = vst.msk [vmem:[%s7 + $0x118] sm:$0xff] %vm2398, %v2369
  %2435 = vst.msk [vmem:[%s7 + $0x120] sm:$0xff] %vm2398, %v2370
  %2436 = vst.msk [vmem:[%s7 + $0x128] sm:$0xff] %vm2398, %v2371
  %2437 = vst.msk [vmem:[%s7 + $0x130] sm:$0xff] %vm2398, %v2372
  %2438 = vst.msk [vmem:[%s7 + $0x138] sm:$0xff] %vm2398, %v2373
  %2439 = vst.msk [vmem:[%s7 + $0x140] sm:$0xff] %vm2398, %v2374
  %2440 = vst.msk [vmem:[%s7 + $0x148] sm:$0xff] %vm2398, %v2375
  %2441 = vst.msk [vmem:[%s7 + $0x150] sm:$0xff] %vm2398, %v2376
  %2442 = vst.msk [vmem:[%s7 + $0x158] sm:$0xff] %vm2398, %v2377
  %2443 = vst.msk [vmem:[%s7 + $0x160] sm:$0xff] %vm2398, %v2378
  %2444 = vst.msk [vmem:[%s7 + $0x168] sm:$0xff] %vm2398, %v2379
  %2445 = vst.msk [vmem:[%s7 + $0x170] sm:$0xff] %vm2398, %v2380
  %2446 = vst.msk [vmem:[%s7 + $0x178] sm:$0xff] %vm2398, %v2381
  %2447 = vst.msk [vmem:[%s7 + $0x180] sm:$0xff] %vm2398, %v2382
  %2448 = vst.msk [vmem:[%s7 + $0x188] sm:$0xff] %vm2398, %v2383
  %2449 = vst.msk [vmem:[%s7 + $0x190] sm:$0xff] %vm2398, %v2384
  %2450 = vst.msk [vmem:[%s7 + $0x198] sm:$0xff] %vm2398, %v2385
  %2451 = vst.msk [vmem:[%s7 + $0x1a0] sm:$0xff] %vm2398, %v2386
  %2452 = vst.msk [vmem:[%s7 + $0x1a8] sm:$0xff] %vm2398, %v2387
  %2453 = vst.msk [vmem:[%s7 + $0x1b0] sm:$0xff] %vm2398, %v2388
  %2454 = vst.msk [vmem:[%s7 + $0x1b8] sm:$0xff] %vm2398, %v2389
  %2455 = vst.msk [vmem:[%s7 + $0x1c0] sm:$0xff] %vm2398, %v2390
  %2456 = vst.msk [vmem:[%s7 + $0x1c8] sm:$0xff] %vm2398, %v2391
  %2457 = vst.msk [vmem:[%s7 + $0x1d0] sm:$0xff] %vm2398, %v2392
  %2458 = vst.msk [vmem:[%s7 + $0x1d8] sm:$0xff] %vm2398, %v2393
  %2459 = vst.msk [vmem:[%s7 + $0x1e0] sm:$0xff] %vm2398, %v2394
  %2460 = vst.msk [vmem:[%s7 + $0x1e8] sm:$0xff] %vm2398, %v2395
  %2461 = vst.msk [vmem:[%s7 + $0x1f0] sm:$0xff] %vm2398, %v2396
  %2462 = vst.msk [vmem:[%s7 + $0x1f8] sm:$0xff] %vm2398, %v2397
  // Predicated region
  $region30: #{deepfm_forward.1} parent=0 // pred_check
    _
  $region31: #{deepfm_forward.1} parent=0 // pred_check_branch
    %2464 = sbr.rel (0) target = $region33
  $region32: #{deepfm_forward.1} parent=0 // pred_region
    _
  $region33: #{deepfm_forward.1} parent=0 // pred_fallthru
    _
  // Predicated region
  $region34: #{deepfm_forward.1} parent=0 // pred_check
    _
  $region35: #{deepfm_forward.1} parent=0 // pred_check_branch
    %2466 = sbr.rel (0) target = $region37
  $region36: #{deepfm_forward.1} parent=0 // pred_region
    _
  $region37: #{deepfm_forward.1} parent=0 // pred_fallthru
    _

</llo_original>
